<compile_context>
chip_gen: v6e
topology: v6e:2x2x1
jax: 0.10.0
libtpu: 0.0.40
codegen_flags: <defaults>
</compile_context>

<pallas_src>
import functools

import jax
import jax.numpy as jnp
from jax import lax
from jax.experimental import pallas as pl
from jax.experimental.pallas import tpu as pltpu


def _round_up(n, m):
    return ((n + m - 1) // m) * m


def video_rnn_kernel(num_layers, *refs):
    f32 = jnp.float32
    bf16 = jnp.bfloat16

    if num_layers > 1:
        (x_ref,        # [T, Bt, Ip]   bf16 time-major input tile
         wih0_ref,     # [Ip, Hp]      bf16 layer-0 input->hidden (pre-transposed)
         whh0_ref,     # [Hp, Hp]      bf16 layer-0 hidden->hidden
         b0_ref,       # [1, Hp]       f32  fused bias (bih + bhh), layer 0
         wihr_ref,     # [L-1, Hp, Hp] bf16 layers 1..L-1 input->hidden
         whhr_ref,     # [L-1, Hp, Hp] bf16 layers 1..L-1 hidden->hidden
         br_ref,       # [L-1, 1, Hp]  f32  fused biases, layers 1..L-1
         wfc_ref,      # [Hp, Cp]      bf16 final Linear
         bfc_ref,      # [1, Cp]       f32
         out_ref,      # [Bt, Cp]      f32  fc(final_hidden)
         fh_ref,       # [Bt, Hp]      f32  final_hidden (= hidden[-1])
         seq_scr,      # VMEM [T*Bt, Hp] f32 pre-activations / layer output seq
         ) = refs
    else:
        (x_ref, wih0_ref, whh0_ref, b0_ref,
         wfc_ref, bfc_ref, out_ref, fh_ref, seq_scr) = refs
        wihr_ref = whhr_ref = br_ref = None

    T, Bt, Ip = x_ref.shape
    Hp = whh0_ref.shape[1]

    # Time-chunk the hoisted projection so the transient dot result stays
    # ~<= 2 MiB regardless of T (perf-review item).  Static Python loop.
    Tc = max(1, min(T, (2 * 1024 * 1024) // max(Bt * Hp * 4, 1)))

    def project_layer0():
        for t0 in range(0, T, Tc):
            tc = min(Tc, T - t0)
            xin = x_ref[pl.ds(t0, tc), :, :].reshape(tc * Bt, Ip)  # bf16
            seq_scr[pl.ds(t0 * Bt, tc * Bt), :] = (
                jnp.dot(xin, wih0_ref[...], preferred_element_type=f32)
                + b0_ref[...])

    def project_inplace(wih_bf16, bias_f32):
        # Consume the previous layer's output sequence (already in seq_scr)
        # and overwrite it, chunk by chunk, with this layer's pre-activations.
        # Rows of each chunk are read before they are written; chunks are
        # disjoint, so the in-place update is exact.
        for t0 in range(0, T, Tc):
            tc = min(Tc, T - t0)
            rows = pl.ds(t0 * Bt, tc * Bt)
            seq_scr[rows, :] = (
                jnp.dot(seq_scr[rows, :].astype(bf16), wih_bf16,
                        preferred_element_type=f32)
                + bias_f32)

    # Full unroll only for short, small tiles; otherwise a partially unrolled
    # fori_loop keeps LLO scheduling visibility without the vreg-spill cliff.
    unroll_full = (T <= 16) and (Bt * Hp <= 32 * 1024)

    def run_recurrence(whh_bf16, store_seq):
        def step_body(h, row):
            pre = seq_scr[pl.ds(row, Bt), :]                       # f32
            hn = jnp.tanh(pre + jnp.dot(h.astype(bf16), whh_bf16,
                                        preferred_element_type=f32))
            if store_seq:
                seq_scr[pl.ds(row, Bt), :] = hn
            return hn

        h0 = jnp.zeros((Bt, Hp), f32)                              # h0 = 0
        if unroll_full:
            h = h0
            for t in range(T):
                h = step_body(h, t * Bt)
            return h

        def step(t, h):
            return step_body(h, pl.multiple_of(t * Bt, Bt))

        return lax.fori_loop(0, T, step, h0, unroll=min(T, 4))

    # Layer 0: hoisted projection of the raw input, then the serial recurrence.
    project_layer0()
    h = run_recurrence(whh0_ref[...], store_seq=(num_layers > 1))

    # Layers 1 .. L-1 consume the previous layer's output sequence in place.
    for l in range(num_layers - 1):
        project_inplace(wihr_ref[l], br_ref[l])
        h = run_recurrence(whhr_ref[l], store_seq=(l < num_layers - 2))

    # final_hidden = hidden[-1]; out = fc(final_hidden)
    fh_ref[...] = h
    out_ref[...] = (jnp.dot(h.astype(bf16), wfc_ref[...],
                            preferred_element_type=f32) + bfc_ref[...])


@functools.partial(jax.jit, static_argnames=("num_layers", "hidden_size",
                                              "num_classes"))
def video_rnn_forward(x, params, *, num_layers, hidden_size, num_classes):
    """x: [B, T, input_size] (batch_first, like the PyTorch module)."""
    B, T, I = x.shape
    H, C = hidden_size, num_classes
    f32, bf16 = jnp.float32, jnp.bfloat16

    # ---- generation-aware batch tiling -------------------------------------
    # v7x has 2 TensorCores/chip: give the "parallel" batch axis >= 2 tiles so
    # it can shard across them.  Single-TC chips prefer one big tile (the grid
    # is a serial loop there; fewer/bigger tiles amortize per-step overhead).
    dev_kind = ""
    try:
        dev_kind = jax.devices()[0].device_kind.lower()
    except Exception:
        pass
    dual_tc = "7" in dev_kind
    want_tiles = 2 if (dual_tc and B >= 16) else 1
    B_TILE = min(_round_up(pl.cdiv(B, want_tiles), 8), 128)
    Bp = _round_up(B, B_TILE)

    Ip = _round_up(I, 128)
    Hp = _round_up(H, 128)
    Cp = _round_up(C, 128)

    # ---- inputs / weights: bf16 MXU operands, f32 fused biases --------------
    # Cast before the transpose (halves the reorder bandwidth); skip the
    # zero-pad materialization when already lane/sublane aligned.
    x_tbi = jnp.transpose(x.astype(bf16), (1, 0, 2))               # [T, B, I]
    if (Bp, Ip) == (B, I):
        x_p = x_tbi
    else:
        x_p = jnp.zeros((T, Bp, Ip), bf16).at[:, :B, :I].set(x_tbi)

    def pad2(w, r, c, dt):
        w = w.astype(dt)
        if w.shape == (r, c):
            return w
        return jnp.zeros((r, c), dt).at[:w.shape[0], :w.shape[1]].set(w)

    def pad3(w, r, c, dt):
        w = w.astype(dt)
        if w.shape[1:] == (r, c):
            return w
        return (jnp.zeros((w.shape[0], r, c), dt)
                .at[:, :w.shape[1], :w.shape[2]].set(w))

    wih0 = pad2(params["wih0"], Ip, Hp, bf16)
    whh0 = pad2(params["whh0"], Hp, Hp, bf16)
    b0 = pad2((params["bih0"] + params["bhh0"]).astype(f32), 1, Hp, f32)
    wfc = pad2(params["wfc"], Hp, Cp, bf16)
    bfc = pad2(params["bfc"].astype(f32), 1, Cp, f32)

    inputs = [x_p, wih0, whh0, b0]
    in_specs = [
        pl.BlockSpec((T, B_TILE, Ip), lambda b: (0, b, 0)),
        pl.BlockSpec((Ip, Hp), lambda b: (0, 0)),
        pl.BlockSpec((Hp, Hp), lambda b: (0, 0)),
        pl.BlockSpec((1, Hp), lambda b: (0, 0)),
    ]
    if num_layers > 1:
        Lm1 = num_layers - 1
        wihr = pad3(params["wihr"], Hp, Hp, bf16)
        whhr = pad3(params["whhr"], Hp, Hp, bf16)
        br = pad3((params["bihr"] + params["bhhr"]).astype(f32), 1, Hp, f32)
        inputs += [wihr, whhr, br]
        in_specs += [
            pl.BlockSpec((Lm1, Hp, Hp), lambda b: (0, 0, 0)),
            pl.BlockSpec((Lm1, Hp, Hp), lambda b: (0, 0, 0)),
            pl.BlockSpec((Lm1, 1, Hp), lambda b: (0, 0, 0)),
        ]
    inputs += [wfc, bfc]
    in_specs += [
        pl.BlockSpec((Hp, Cp), lambda b: (0, 0)),
        pl.BlockSpec((1, Cp), lambda b: (0, 0)),
    ]

    # ---- explicit VMEM budget (default scoped limit is only 16-32 MiB) ------
    seq_bytes = T * B_TILE * Hp * 4                                   # scratch
    x_bytes = 2 * T * B_TILE * Ip * 2                                 # 2x-buffered bf16 tile
    w_bytes = 2 * ((Ip * Hp + Hp * Hp + Hp * Cp) * 2 + (Hp + Cp) * 4)
    if num_layers > 1:
        w_bytes += 2 * (num_layers - 1) * (2 * Hp * Hp * 2 + Hp * 4)
    out_bytes = 2 * B_TILE * (Cp + Hp) * 4
    tc_rows = max(1, min(T, (2 * 1024 * 1024) // max(B_TILE * Hp * 4, 1)))
    transient = 2 * tc_rows * B_TILE * Hp * 4                         # chunked proj temp
    need = seq_bytes + x_bytes + w_bytes + out_bytes + transient
    vmem_cap = (60 if dual_tc else 100) * 2**20                       # v7x: 64 MiB physical
    vmem_limit = int(min(max(2 * need, 32 * 2**20), vmem_cap))

    kernel = functools.partial(video_rnn_kernel, num_layers)

    out_p, fh_p = pl.pallas_call(
        kernel,
        grid=(Bp // B_TILE,),
        in_specs=in_specs,
        out_specs=(
            pl.BlockSpec((B_TILE, Cp), lambda b: (b, 0)),
            pl.BlockSpec((B_TILE, Hp), lambda b: (b, 0)),
        ),
        out_shape=(jax.ShapeDtypeStruct((Bp, Cp), f32),
                   jax.ShapeDtypeStruct((Bp, Hp), f32)),
        scratch_shapes=[pltpu.VMEM((T * B_TILE, Hp), f32)],
        compiler_params=pltpu.CompilerParams(
            dimension_semantics=("parallel",),
            vmem_limit_bytes=vmem_limit),
    )(*inputs)

    return out_p[:B, :C], fh_p[:B, :H]


def init_params(key, input_size, hidden_size, num_layers, num_classes):
    """Deterministic synthetic parameters (PyTorch-style uniform(-1/sqrt(H), 1/sqrt(H))).

    Weights stored pre-transposed as [in_features, out_features]."""
    I, H, C, L = input_size, hidden_size, num_classes, num_layers
    Lr = max(L - 1, 1)
    bound = 1.0 / float(H) ** 0.5
    keys = jax.random.split(key, 10)
    u = lambda k, shape: jax.random.uniform(k, shape, jnp.float32, -bound, bound)
    return dict(
        wih0=u(keys[0], (I, H)), bih0=u(keys[1], (1, H)),
        whh0=u(keys[2], (H, H)), bhh0=u(keys[3], (1, H)),
        wihr=u(keys[4], (Lr, H, H)), bihr=u(keys[5], (Lr, 1, H)),
        whhr=u(keys[6], (Lr, H, H)), bhhr=u(keys[7], (Lr, 1, H)),
        wfc=u(keys[8], (H, C)), bfc=u(keys[9], (1, C)),
    )


def reference_forward(x, params, num_layers):
    """Pure-JAX f32 reference mirroring nn.RNN(tanh, batch_first) + Linear."""
    B = x.shape[0]
    H = params["whh0"].shape[0]

    def run_layer(seq_in, wih, bih, whh, bhh):
        h = jnp.zeros((B, H), jnp.float32)
        outs = []
        for t in range(seq_in.shape[1]):
            h = jnp.tanh(seq_in[:, t, :] @ wih + bih + h @ whh + bhh)
            outs.append(h)
        return jnp.stack(outs, axis=1), h

    seq, h = run_layer(x, params["wih0"], params["bih0"],
                       params["whh0"], params["bhh0"])
    for l in range(num_layers - 1):
        seq, h = run_layer(seq, params["wihr"][l], params["bihr"][l],
                           params["whhr"][l], params["bhhr"][l])
    out = h @ params["wfc"] + params["bfc"]
    return out, h


if __name__ == "__main__":
    B, T = 2, 8
    INPUT_SIZE, HIDDEN_SIZE, NUM_LAYERS, NUM_CLASSES = 16, 32, 2, 10

    root = jax.random.PRNGKey(0)
    kx, kp = jax.random.split(root)
    x = jax.random.normal(kx, (B, T, INPUT_SIZE), jnp.float32)
    params = init_params(kp, INPUT_SIZE, HIDDEN_SIZE, NUM_LAYERS, NUM_CLASSES)

    out, final_hidden = video_rnn_forward(
        x, params,
        num_layers=NUM_LAYERS, hidden_size=HIDDEN_SIZE, num_classes=NUM_CLASSES)
    jax.block_until_ready((out, final_hidden))

    ref_out, ref_fh = reference_forward(x, params, NUM_LAYERS)
    assert out.shape == (B, NUM_CLASSES) and final_hidden.shape == (B, HIDDEN_SIZE)
    # bf16 MXU operands (f32 accumulation) => slightly looser tolerance vs the
    # pure-f32 reference.
    assert jnp.allclose(out, ref_out, rtol=4e-2, atol=4e-2)
    assert jnp.allclose(final_hidden, ref_fh, rtol=4e-2, atol=4e-2)

    print("KERNEL_OK")
</pallas_src>

<mosaic_0001>
module attributes {stable_mosaic.version = 11 : i64} {
  func.func @video_rnn_kernel(%arg0: i32, %arg1: memref<8x8x128xbf16, #tpu.memory_space<vmem>>, %arg2: memref<128x128xbf16, #tpu.memory_space<vmem>>, %arg3: memref<128x128xbf16, #tpu.memory_space<vmem>>, %arg4: memref<1x128xf32, #tpu.memory_space<vmem>>, %arg5: memref<1x128x128xbf16, #tpu.memory_space<vmem>>, %arg6: memref<1x128x128xbf16, #tpu.memory_space<vmem>>, %arg7: memref<1x1x128xf32, #tpu.memory_space<vmem>>, %arg8: memref<128x128xbf16, #tpu.memory_space<vmem>>, %arg9: memref<1x128xf32, #tpu.memory_space<vmem>>, %arg10: memref<8x128xf32, #tpu.memory_space<vmem>>, %arg11: memref<8x128xf32, #tpu.memory_space<vmem>>, %arg12: memref<64x128xf32, #tpu.memory_space<vmem>>) attributes {dimension_semantics = [#tpu.dimension_semantics<parallel>], iteration_bounds = array<i64: 1>, scalar_prefetch = 0 : i64, scratch_operands = 1 : i64, tpu.core_type = #tpu.core_type<tc>, window_params = [{transform_indices = @transform_0, window_bounds = array<i64: 8, 8, 128>}, {pipeline_mode = #tpu.pipeline_mode<synchronous>, transform_indices = @transform_1, window_bounds = array<i64: 128, 128>}, {pipeline_mode = #tpu.pipeline_mode<synchronous>, transform_indices = @transform_2, window_bounds = array<i64: 128, 128>}, {pipeline_mode = #tpu.pipeline_mode<synchronous>, transform_indices = @transform_3, window_bounds = array<i64: 1, 128>}, {pipeline_mode = #tpu.pipeline_mode<synchronous>, transform_indices = @transform_4, window_bounds = array<i64: 1, 128, 128>}, {pipeline_mode = #tpu.pipeline_mode<synchronous>, transform_indices = @transform_5, window_bounds = array<i64: 1, 128, 128>}, {pipeline_mode = #tpu.pipeline_mode<synchronous>, transform_indices = @transform_6, window_bounds = array<i64: 1, 1, 128>}, {pipeline_mode = #tpu.pipeline_mode<synchronous>, transform_indices = @transform_7, window_bounds = array<i64: 128, 128>}, {pipeline_mode = #tpu.pipeline_mode<synchronous>, transform_indices = @transform_8, window_bounds = array<i64: 1, 128>}, {transform_indices = @transform_9, window_bounds = array<i64: 8, 128>}, {transform_indices = @transform_10, window_bounds = array<i64: 8, 128>}]} {
    %c0 = arith.constant 0 : index
    %c0_0 = arith.constant 0 : index
    %c0_1 = arith.constant 0 : index
    %0 = vector.load %arg1[%c0, %c0_0, %c0_1] : memref<8x8x128xbf16, #tpu.memory_space<vmem>>, vector<8x8x128xbf16>
    %1 = vector.shape_cast %0 : vector<8x8x128xbf16> to vector<64x128xbf16>
    %c0_2 = arith.constant 0 : index
    %c0_3 = arith.constant 0 : index
    %2 = vector.load %arg2[%c0_2, %c0_3] : memref<128x128xbf16, #tpu.memory_space<vmem>>, vector<128x128xbf16>
    %cst = arith.constant dense<0.000000e+00> : vector<64x128xf32>
    %3 = tpu.matmul %1, %2, %cst {dimension_numbers = #tpu.dot_dimension_numbers<[1], [0], [0], [1], [0, 0, 1, 1], [], []>} : vector<64x128xbf16>, vector<128x128xbf16>, vector<64x128xf32> -> vector<64x128xf32>
    %c0_4 = arith.constant 0 : index
    %c0_5 = arith.constant 0 : index
    %4 = vector.load %arg4[%c0_4, %c0_5] : memref<1x128xf32, #tpu.memory_space<vmem>>, vector<1x128xf32>
    %5 = vector.broadcast %4 : vector<1x128xf32> to vector<64x128xf32>
    %6 = arith.addf %3, %5 : vector<64x128xf32>
    %c0_6 = arith.constant 0 : index
    %c0_7 = arith.constant 0 : index
    %7 = vector.load %arg12[%c0_6, %c0_7] : memref<64x128xf32, #tpu.memory_space<vmem>>, vector<64x128xf32>
    tpu.vector_store %arg12[%c0_6, %c0_7], %6 {strides = array<i32>} : memref<64x128xf32, #tpu.memory_space<vmem>>, vector<64x128xf32>,
    %c0_8 = arith.constant 0 : index
    %c0_9 = arith.constant 0 : index
    %8 = vector.load %arg3[%c0_8, %c0_9] : memref<128x128xbf16, #tpu.memory_space<vmem>>, vector<128x128xbf16>
    %cst_10 = arith.constant 0.000000e+00 : f32
    %9 = vector.broadcast %cst_10 : f32 to vector<8x128xf32>
    %c0_11 = arith.constant 0 : index
    %c0_12 = arith.constant 0 : index
    %10 = vector.load %arg12[%c0_11, %c0_12] : memref<64x128xf32, #tpu.memory_space<vmem>>, vector<8x128xf32>
    %11 = arith.truncf %9 : vector<8x128xf32> to vector<8x128xbf16>
    %cst_13 = arith.constant dense<0.000000e+00> : vector<8x128xf32>
    %12 = tpu.matmul %11, %8, %cst_13 {dimension_numbers = #tpu.dot_dimension_numbers<[1], [0], [0], [1], [0, 0, 1, 1], [], []>} : vector<8x128xbf16>, vector<128x128xbf16>, vector<8x128xf32> -> vector<8x128xf32>
    %13 = arith.addf %10, %12 : vector<8x128xf32>
    %14 = math.tanh %13 : vector<8x128xf32>
    %c0_14 = arith.constant 0 : index
    %c0_15 = arith.constant 0 : index
    %15 = vector.load %arg12[%c0_14, %c0_15] : memref<64x128xf32, #tpu.memory_space<vmem>>, vector<8x128xf32>
    tpu.vector_store %arg12[%c0_14, %c0_15], %14 {strides = array<i32>} : memref<64x128xf32, #tpu.memory_space<vmem>>, vector<8x128xf32>,
    %c8 = arith.constant 8 : index
    %c0_16 = arith.constant 0 : index
    %16 = vector.load %arg12[%c8, %c0_16] : memref<64x128xf32, #tpu.memory_space<vmem>>, vector<8x128xf32>
    %17 = arith.truncf %14 : vector<8x128xf32> to vector<8x128xbf16>
    %cst_17 = arith.constant dense<0.000000e+00> : vector<8x128xf32>
    %18 = tpu.matmul %17, %8, %cst_17 {dimension_numbers = #tpu.dot_dimension_numbers<[1], [0], [0], [1], [0, 0, 1, 1], [], []>} : vector<8x128xbf16>, vector<128x128xbf16>, vector<8x128xf32> -> vector<8x128xf32>
    %19 = arith.addf %16, %18 : vector<8x128xf32>
    %20 = math.tanh %19 : vector<8x128xf32>
    %c8_18 = arith.constant 8 : index
    %c0_19 = arith.constant 0 : index
    %21 = vector.load %arg12[%c8_18, %c0_19] : memref<64x128xf32, #tpu.memory_space<vmem>>, vector<8x128xf32>
    tpu.vector_store %arg12[%c8_18, %c0_19], %20 {strides = array<i32>} : memref<64x128xf32, #tpu.memory_space<vmem>>, vector<8x128xf32>,
    %c16 = arith.constant 16 : index
    %c0_20 = arith.constant 0 : index
    %22 = vector.load %arg12[%c16, %c0_20] : memref<64x128xf32, #tpu.memory_space<vmem>>, vector<8x128xf32>
    %23 = arith.truncf %20 : vector<8x128xf32> to vector<8x128xbf16>
    %cst_21 = arith.constant dense<0.000000e+00> : vector<8x128xf32>
    %24 = tpu.matmul %23, %8, %cst_21 {dimension_numbers = #tpu.dot_dimension_numbers<[1], [0], [0], [1], [0, 0, 1, 1], [], []>} : vector<8x128xbf16>, vector<128x128xbf16>, vector<8x128xf32> -> vector<8x128xf32>
    %25 = arith.addf %22, %24 : vector<8x128xf32>
    %26 = math.tanh %25 : vector<8x128xf32>
    %c16_22 = arith.constant 16 : index
    %c0_23 = arith.constant 0 : index
    %27 = vector.load %arg12[%c16_22, %c0_23] : memref<64x128xf32, #tpu.memory_space<vmem>>, vector<8x128xf32>
    tpu.vector_store %arg12[%c16_22, %c0_23], %26 {strides = array<i32>} : memref<64x128xf32, #tpu.memory_space<vmem>>, vector<8x128xf32>,
    %c24 = arith.constant 24 : index
    %c0_24 = arith.constant 0 : index
    %28 = vector.load %arg12[%c24, %c0_24] : memref<64x128xf32, #tpu.memory_space<vmem>>, vector<8x128xf32>
    %29 = arith.truncf %26 : vector<8x128xf32> to vector<8x128xbf16>
    %cst_25 = arith.constant dense<0.000000e+00> : vector<8x128xf32>
    %30 = tpu.matmul %29, %8, %cst_25 {dimension_numbers = #tpu.dot_dimension_numbers<[1], [0], [0], [1], [0, 0, 1, 1], [], []>} : vector<8x128xbf16>, vector<128x128xbf16>, vector<8x128xf32> -> vector<8x128xf32>
    %31 = arith.addf %28, %30 : vector<8x128xf32>
    %32 = math.tanh %31 : vector<8x128xf32>
    %c24_26 = arith.constant 24 : index
    %c0_27 = arith.constant 0 : index
    %33 = vector.load %arg12[%c24_26, %c0_27] : memref<64x128xf32, #tpu.memory_space<vmem>>, vector<8x128xf32>
    tpu.vector_store %arg12[%c24_26, %c0_27], %32 {strides = array<i32>} : memref<64x128xf32, #tpu.memory_space<vmem>>, vector<8x128xf32>,
    %c32 = arith.constant 32 : index
    %c0_28 = arith.constant 0 : index
    %34 = vector.load %arg12[%c32, %c0_28] : memref<64x128xf32, #tpu.memory_space<vmem>>, vector<8x128xf32>
    %35 = arith.truncf %32 : vector<8x128xf32> to vector<8x128xbf16>
    %cst_29 = arith.constant dense<0.000000e+00> : vector<8x128xf32>
    %36 = tpu.matmul %35, %8, %cst_29 {dimension_numbers = #tpu.dot_dimension_numbers<[1], [0], [0], [1], [0, 0, 1, 1], [], []>} : vector<8x128xbf16>, vector<128x128xbf16>, vector<8x128xf32> -> vector<8x128xf32>
    %37 = arith.addf %34, %36 : vector<8x128xf32>
    %38 = math.tanh %37 : vector<8x128xf32>
    %c32_30 = arith.constant 32 : index
    %c0_31 = arith.constant 0 : index
    %39 = vector.load %arg12[%c32_30, %c0_31] : memref<64x128xf32, #tpu.memory_space<vmem>>, vector<8x128xf32>
    tpu.vector_store %arg12[%c32_30, %c0_31], %38 {strides = array<i32>} : memref<64x128xf32, #tpu.memory_space<vmem>>, vector<8x128xf32>,
    %c40 = arith.constant 40 : index
    %c0_32 = arith.constant 0 : index
    %40 = vector.load %arg12[%c40, %c0_32] : memref<64x128xf32, #tpu.memory_space<vmem>>, vector<8x128xf32>
    %41 = arith.truncf %38 : vector<8x128xf32> to vector<8x128xbf16>
    %cst_33 = arith.constant dense<0.000000e+00> : vector<8x128xf32>
    %42 = tpu.matmul %41, %8, %cst_33 {dimension_numbers = #tpu.dot_dimension_numbers<[1], [0], [0], [1], [0, 0, 1, 1], [], []>} : vector<8x128xbf16>, vector<128x128xbf16>, vector<8x128xf32> -> vector<8x128xf32>
    %43 = arith.addf %40, %42 : vector<8x128xf32>
    %44 = math.tanh %43 : vector<8x128xf32>
    %c40_34 = arith.constant 40 : index
    %c0_35 = arith.constant 0 : index
    %45 = vector.load %arg12[%c40_34, %c0_35] : memref<64x128xf32, #tpu.memory_space<vmem>>, vector<8x128xf32>
    tpu.vector_store %arg12[%c40_34, %c0_35], %44 {strides = array<i32>} : memref<64x128xf32, #tpu.memory_space<vmem>>, vector<8x128xf32>,
    %c48 = arith.constant 48 : index
    %c0_36 = arith.constant 0 : index
    %46 = vector.load %arg12[%c48, %c0_36] : memref<64x128xf32, #tpu.memory_space<vmem>>, vector<8x128xf32>
    %47 = arith.truncf %44 : vector<8x128xf32> to vector<8x128xbf16>
    %cst_37 = arith.constant dense<0.000000e+00> : vector<8x128xf32>
    %48 = tpu.matmul %47, %8, %cst_37 {dimension_numbers = #tpu.dot_dimension_numbers<[1], [0], [0], [1], [0, 0, 1, 1], [], []>} : vector<8x128xbf16>, vector<128x128xbf16>, vector<8x128xf32> -> vector<8x128xf32>
    %49 = arith.addf %46, %48 : vector<8x128xf32>
    %50 = math.tanh %49 : vector<8x128xf32>
    %c48_38 = arith.constant 48 : index
    %c0_39 = arith.constant 0 : index
    %51 = vector.load %arg12[%c48_38, %c0_39] : memref<64x128xf32, #tpu.memory_space<vmem>>, vector<8x128xf32>
    tpu.vector_store %arg12[%c48_38, %c0_39], %50 {strides = array<i32>} : memref<64x128xf32, #tpu.memory_space<vmem>>, vector<8x128xf32>,
    %c56 = arith.constant 56 : index
    %c0_40 = arith.constant 0 : index
    %52 = vector.load %arg12[%c56, %c0_40] : memref<64x128xf32, #tpu.memory_space<vmem>>, vector<8x128xf32>
    %53 = arith.truncf %50 : vector<8x128xf32> to vector<8x128xbf16>
    %cst_41 = arith.constant dense<0.000000e+00> : vector<8x128xf32>
    %54 = tpu.matmul %53, %8, %cst_41 {dimension_numbers = #tpu.dot_dimension_numbers<[1], [0], [0], [1], [0, 0, 1, 1], [], []>} : vector<8x128xbf16>, vector<128x128xbf16>, vector<8x128xf32> -> vector<8x128xf32>
    %55 = arith.addf %52, %54 : vector<8x128xf32>
    %56 = math.tanh %55 : vector<8x128xf32>
    %c56_42 = arith.constant 56 : index
    %c0_43 = arith.constant 0 : index
    %57 = vector.load %arg12[%c56_42, %c0_43] : memref<64x128xf32, #tpu.memory_space<vmem>>, vector<8x128xf32>
    tpu.vector_store %arg12[%c56_42, %c0_43], %56 {strides = array<i32>} : memref<64x128xf32, #tpu.memory_space<vmem>>, vector<8x128xf32>,
    %c0_44 = arith.constant 0 : index
    %c0_45 = arith.constant 0 : index
    %c0_46 = arith.constant 0 : index
    %58 = vector.load %arg5[%c0_44, %c0_45, %c0_46] : memref<1x128x128xbf16, #tpu.memory_space<vmem>>, vector<1x128x128xbf16>
    %59 = vector.shape_cast %58 : vector<1x128x128xbf16> to vector<128x128xbf16>
    %c0_47 = arith.constant 0 : index
    %c0_48 = arith.constant 0 : index
    %c0_49 = arith.constant 0 : index
    %60 = vector.load %arg7[%c0_47, %c0_48, %c0_49] : memref<1x1x128xf32, #tpu.memory_space<vmem>>, vector<1x1x128xf32>
    %61 = vector.shape_cast %60 : vector<1x1x128xf32> to vector<1x128xf32>
    %c0_50 = arith.constant 0 : index
    %c0_51 = arith.constant 0 : index
    %62 = vector.load %arg12[%c0_50, %c0_51] : memref<64x128xf32, #tpu.memory_space<vmem>>, vector<64x128xf32>
    %63 = arith.truncf %62 : vector<64x128xf32> to vector<64x128xbf16>
    %cst_52 = arith.constant dense<0.000000e+00> : vector<64x128xf32>
    %64 = tpu.matmul %63, %59, %cst_52 {dimension_numbers = #tpu.dot_dimension_numbers<[1], [0], [0], [1], [0, 0, 1, 1], [], []>} : vector<64x128xbf16>, vector<128x128xbf16>, vector<64x128xf32> -> vector<64x128xf32>
    %65 = vector.broadcast %61 : vector<1x128xf32> to vector<64x128xf32>
    %66 = arith.addf %64, %65 : vector<64x128xf32>
    %c0_53 = arith.constant 0 : index
    %c0_54 = arith.constant 0 : index
    %67 = vector.load %arg12[%c0_53, %c0_54] : memref<64x128xf32, #tpu.memory_space<vmem>>, vector<64x128xf32>
    tpu.vector_store %arg12[%c0_53, %c0_54], %66 {strides = array<i32>} : memref<64x128xf32, #tpu.memory_space<vmem>>, vector<64x128xf32>,
    %c0_55 = arith.constant 0 : index
    %c0_56 = arith.constant 0 : index
    %c0_57 = arith.constant 0 : index
    %68 = vector.load %arg6[%c0_55, %c0_56, %c0_57] : memref<1x128x128xbf16, #tpu.memory_space<vmem>>, vector<1x128x128xbf16>
    %69 = vector.shape_cast %68 : vector<1x128x128xbf16> to vector<128x128xbf16>
    %cst_58 = arith.constant 0.000000e+00 : f32
    %70 = vector.broadcast %cst_58 : f32 to vector<8x128xf32>
    %c0_59 = arith.constant 0 : index
    %c0_60 = arith.constant 0 : index
    %71 = vector.load %arg12[%c0_59, %c0_60] : memref<64x128xf32, #tpu.memory_space<vmem>>, vector<8x128xf32>
    %72 = arith.truncf %70 : vector<8x128xf32> to vector<8x128xbf16>
    %cst_61 = arith.constant dense<0.000000e+00> : vector<8x128xf32>
    %73 = tpu.matmul %72, %69, %cst_61 {dimension_numbers = #tpu.dot_dimension_numbers<[1], [0], [0], [1], [0, 0, 1, 1], [], []>} : vector<8x128xbf16>, vector<128x128xbf16>, vector<8x128xf32> -> vector<8x128xf32>
    %74 = arith.addf %71, %73 : vector<8x128xf32>
    %75 = math.tanh %74 : vector<8x128xf32>
    %c8_62 = arith.constant 8 : index
    %c0_63 = arith.constant 0 : index
    %76 = vector.load %arg12[%c8_62, %c0_63] : memref<64x128xf32, #tpu.memory_space<vmem>>, vector<8x128xf32>
    %77 = arith.truncf %75 : vector<8x128xf32> to vector<8x128xbf16>
    %cst_64 = arith.constant dense<0.000000e+00> : vector<8x128xf32>
    %78 = tpu.matmul %77, %69, %cst_64 {dimension_numbers = #tpu.dot_dimension_numbers<[1], [0], [0], [1], [0, 0, 1, 1], [], []>} : vector<8x128xbf16>, vector<128x128xbf16>, vector<8x128xf32> -> vector<8x128xf32>
    %79 = arith.addf %76, %78 : vector<8x128xf32>
    %80 = math.tanh %79 : vector<8x128xf32>
    %c16_65 = arith.constant 16 : index
    %c0_66 = arith.constant 0 : index
    %81 = vector.load %arg12[%c16_65, %c0_66] : memref<64x128xf32, #tpu.memory_space<vmem>>, vector<8x128xf32>
    %82 = arith.truncf %80 : vector<8x128xf32> to vector<8x128xbf16>
    %cst_67 = arith.constant dense<0.000000e+00> : vector<8x128xf32>
    %83 = tpu.matmul %82, %69, %cst_67 {dimension_numbers = #tpu.dot_dimension_numbers<[1], [0], [0], [1], [0, 0, 1, 1], [], []>} : vector<8x128xbf16>, vector<128x128xbf16>, vector<8x128xf32> -> vector<8x128xf32>
    %84 = arith.addf %81, %83 : vector<8x128xf32>
    %85 = math.tanh %84 : vector<8x128xf32>
    %c24_68 = arith.constant 24 : index
    %c0_69 = arith.constant 0 : index
    %86 = vector.load %arg12[%c24_68, %c0_69] : memref<64x128xf32, #tpu.memory_space<vmem>>, vector<8x128xf32>
    %87 = arith.truncf %85 : vector<8x128xf32> to vector<8x128xbf16>
    %cst_70 = arith.constant dense<0.000000e+00> : vector<8x128xf32>
    %88 = tpu.matmul %87, %69, %cst_70 {dimension_numbers = #tpu.dot_dimension_numbers<[1], [0], [0], [1], [0, 0, 1, 1], [], []>} : vector<8x128xbf16>, vector<128x128xbf16>, vector<8x128xf32> -> vector<8x128xf32>
    %89 = arith.addf %86, %88 : vector<8x128xf32>
    %90 = math.tanh %89 : vector<8x128xf32>
    %c32_71 = arith.constant 32 : index
    %c0_72 = arith.constant 0 : index
    %91 = vector.load %arg12[%c32_71, %c0_72] : memref<64x128xf32, #tpu.memory_space<vmem>>, vector<8x128xf32>
    %92 = arith.truncf %90 : vector<8x128xf32> to vector<8x128xbf16>
    %cst_73 = arith.constant dense<0.000000e+00> : vector<8x128xf32>
    %93 = tpu.matmul %92, %69, %cst_73 {dimension_numbers = #tpu.dot_dimension_numbers<[1], [0], [0], [1], [0, 0, 1, 1], [], []>} : vector<8x128xbf16>, vector<128x128xbf16>, vector<8x128xf32> -> vector<8x128xf32>
    %94 = arith.addf %91, %93 : vector<8x128xf32>
    %95 = math.tanh %94 : vector<8x128xf32>
    %c40_74 = arith.constant 40 : index
    %c0_75 = arith.constant 0 : index
    %96 = vector.load %arg12[%c40_74, %c0_75] : memref<64x128xf32, #tpu.memory_space<vmem>>, vector<8x128xf32>
    %97 = arith.truncf %95 : vector<8x128xf32> to vector<8x128xbf16>
    %cst_76 = arith.constant dense<0.000000e+00> : vector<8x128xf32>
    %98 = tpu.matmul %97, %69, %cst_76 {dimension_numbers = #tpu.dot_dimension_numbers<[1], [0], [0], [1], [0, 0, 1, 1], [], []>} : vector<8x128xbf16>, vector<128x128xbf16>, vector<8x128xf32> -> vector<8x128xf32>
    %99 = arith.addf %96, %98 : vector<8x128xf32>
    %100 = math.tanh %99 : vector<8x128xf32>
    %c48_77 = arith.constant 48 : index
    %c0_78 = arith.constant 0 : index
    %101 = vector.load %arg12[%c48_77, %c0_78] : memref<64x128xf32, #tpu.memory_space<vmem>>, vector<8x128xf32>
    %102 = arith.truncf %100 : vector<8x128xf32> to vector<8x128xbf16>
    %cst_79 = arith.constant dense<0.000000e+00> : vector<8x128xf32>
    %103 = tpu.matmul %102, %69, %cst_79 {dimension_numbers = #tpu.dot_dimension_numbers<[1], [0], [0], [1], [0, 0, 1, 1], [], []>} : vector<8x128xbf16>, vector<128x128xbf16>, vector<8x128xf32> -> vector<8x128xf32>
    %104 = arith.addf %101, %103 : vector<8x128xf32>
    %105 = math.tanh %104 : vector<8x128xf32>
    %c56_80 = arith.constant 56 : index
    %c0_81 = arith.constant 0 : index
    %106 = vector.load %arg12[%c56_80, %c0_81] : memref<64x128xf32, #tpu.memory_space<vmem>>, vector<8x128xf32>
    %107 = arith.truncf %105 : vector<8x128xf32> to vector<8x128xbf16>
    %cst_82 = arith.constant dense<0.000000e+00> : vector<8x128xf32>
    %108 = tpu.matmul %107, %69, %cst_82 {dimension_numbers = #tpu.dot_dimension_numbers<[1], [0], [0], [1], [0, 0, 1, 1], [], []>} : vector<8x128xbf16>, vector<128x128xbf16>, vector<8x128xf32> -> vector<8x128xf32>
    %109 = arith.addf %106, %108 : vector<8x128xf32>
    %110 = math.tanh %109 : vector<8x128xf32>
    %c0_83 = arith.constant 0 : index
    %c0_84 = arith.constant 0 : index
    %111 = vector.load %arg11[%c0_83, %c0_84] : memref<8x128xf32, #tpu.memory_space<vmem>>, vector<8x128xf32>
    tpu.vector_store %arg11[%c0_83, %c0_84], %110 {strides = array<i32>} : memref<8x128xf32, #tpu.memory_space<vmem>>, vector<8x128xf32>,
    %112 = arith.truncf %110 : vector<8x128xf32> to vector<8x128xbf16>
    %c0_85 = arith.constant 0 : index
    %c0_86 = arith.constant 0 : index
    %113 = vector.load %arg8[%c0_85, %c0_86] : memref<128x128xbf16, #tpu.memory_space<vmem>>, vector<128x128xbf16>
    %cst_87 = arith.constant dense<0.000000e+00> : vector<8x128xf32>
    %114 = tpu.matmul %112, %113, %cst_87 {dimension_numbers = #tpu.dot_dimension_numbers<[1], [0], [0], [1], [0, 0, 1, 1], [], []>} : vector<8x128xbf16>, vector<128x128xbf16>, vector<8x128xf32> -> vector<8x128xf32>
    %c0_88 = arith.constant 0 : index
    %c0_89 = arith.constant 0 : index
    %115 = vector.load %arg9[%c0_88, %c0_89] : memref<1x128xf32, #tpu.memory_space<vmem>>, vector<1x128xf32>
    %116 = vector.broadcast %115 : vector<1x128xf32> to vector<8x128xf32>
    %117 = arith.addf %114, %116 : vector<8x128xf32>
    %c0_90 = arith.constant 0 : index
    %c0_91 = arith.constant 0 : index
    %118 = vector.load %arg10[%c0_90, %c0_91] : memref<8x128xf32, #tpu.memory_space<vmem>>, vector<8x128xf32>
    tpu.vector_store %arg10[%c0_90, %c0_91], %117 {strides = array<i32>} : memref<8x128xf32, #tpu.memory_space<vmem>>, vector<8x128xf32>,
    return
  }
  func.func @transform_0(%arg0: i32) -> (i32, i32, i32) {
    %c0_i32 = arith.constant 0 : i32
    %c0_i32_0 = arith.constant 0 : i32
    %c0_i32_1 = arith.constant 0 : i32
    return %c0_i32, %arg0, %c0_i32_0 : i32, i32, i32
  }
  func.func @transform_1(%arg0: i32) -> (i32, i32) {
    %c0_i32 = arith.constant 0 : i32
    %c0_i32_0 = arith.constant 0 : i32
    %c0_i32_1 = arith.constant 0 : i32
    return %c0_i32, %c0_i32_0 : i32, i32
  }
  func.func @transform_2(%arg0: i32) -> (i32, i32) {
    %c0_i32 = arith.constant 0 : i32
    %c0_i32_0 = arith.constant 0 : i32
    %c0_i32_1 = arith.constant 0 : i32
    return %c0_i32, %c0_i32_0 : i32, i32
  }
  func.func @transform_3(%arg0: i32) -> (i32, i32) {
    %c0_i32 = arith.constant 0 : i32
    %c0_i32_0 = arith.constant 0 : i32
    %c0_i32_1 = arith.constant 0 : i32
    return %c0_i32, %c0_i32_0 : i32, i32
  }
  func.func @transform_4(%arg0: i32) -> (i32, i32, i32) {
    %c0_i32 = arith.constant 0 : i32
    %c0_i32_0 = arith.constant 0 : i32
    %c0_i32_1 = arith.constant 0 : i32
    %c0_i32_2 = arith.constant 0 : i32
    return %c0_i32, %c0_i32_0, %c0_i32_1 : i32, i32, i32
  }
  func.func @transform_5(%arg0: i32) -> (i32, i32, i32) {
    %c0_i32 = arith.constant 0 : i32
    %c0_i32_0 = arith.constant 0 : i32
    %c0_i32_1 = arith.constant 0 : i32
    %c0_i32_2 = arith.constant 0 : i32
    return %c0_i32, %c0_i32_0, %c0_i32_1 : i32, i32, i32
  }
  func.func @transform_6(%arg0: i32) -> (i32, i32, i32) {
    %c0_i32 = arith.constant 0 : i32
    %c0_i32_0 = arith.constant 0 : i32
    %c0_i32_1 = arith.constant 0 : i32
    %c0_i32_2 = arith.constant 0 : i32
    return %c0_i32, %c0_i32_0, %c0_i32_1 : i32, i32, i32
  }
  func.func @transform_7(%arg0: i32) -> (i32, i32) {
    %c0_i32 = arith.constant 0 : i32
    %c0_i32_0 = arith.constant 0 : i32
    %c0_i32_1 = arith.constant 0 : i32
    return %c0_i32, %c0_i32_0 : i32, i32
  }
  func.func @transform_8(%arg0: i32) -> (i32, i32) {
    %c0_i32 = arith.constant 0 : i32
    %c0_i32_0 = arith.constant 0 : i32
    %c0_i32_1 = arith.constant 0 : i32
    return %c0_i32, %c0_i32_0 : i32, i32
  }
  func.func @transform_9(%arg0: i32) -> (i32, i32) {
    %c0_i32 = arith.constant 0 : i32
    %c0_i32_0 = arith.constant 0 : i32
    return %arg0, %c0_i32 : i32, i32
  }
  func.func @transform_10(%arg0: i32) -> (i32, i32) {
    %c0_i32 = arith.constant 0 : i32
    %c0_i32_0 = arith.constant 0 : i32
    return %arg0, %c0_i32 : i32, i32
  }
}

</mosaic_0001>

<llo_original>
// kernel: video_rnn_forward.1
$region0: #{video_rnn_forward.1}
  #allocation0 [shape = 'u32[]', space=smem, size = 0x4, offset = 0x4, fixed_abs, tag = 'smem constant byte address 0x4 - core index']
  #allocation1 [shape = 'u32[144,128]{1,0:T(1,128)}', space=vmem, size = 0x12000, scoped, tag = 'internal scratch']
  #allocation2 [shape = 'f32[64,128]{1,0:T(8,128)}', space=vmem, size = 0x8000, scoped, tag = 'scratch operand']
  %s0 = inlined_call_operand.vmem [shape: bf16[8,8,128], index: 0, kind: input, shape index: {}]
  %s1 = inlined_call_operand.vmem [shape: bf16[128,128], index: 1, kind: input, shape index: {}]
  %s2 = inlined_call_operand.vmem [shape: bf16[128,128], index: 2, kind: input, shape index: {}]
  %s3 = inlined_call_operand.vmem [shape: f32[1,128], index: 3, kind: input, shape index: {}]
  %s4 = inlined_call_operand.vmem [shape: bf16[1,128,128], index: 4, kind: input, shape index: {}]
  %s5 = inlined_call_operand.vmem [shape: bf16[1,128,128], index: 5, kind: input, shape index: {}]
  %s6 = inlined_call_operand.vmem [shape: f32[1,1,128], index: 6, kind: input, shape index: {}]
  %s7 = inlined_call_operand.vmem [shape: bf16[128,128], index: 7, kind: input, shape index: {}]
  %s8 = inlined_call_operand.vmem [shape: f32[1,128], index: 8, kind: input, shape index: {}]
  %s9 = inlined_call_operand.vmem [shape: f32[8,128], index: 9, kind: output, shape index: {0}]
  %s10 = inlined_call_operand.vmem [shape: f32[8,128], index: 10, kind: output, shape index: {1}]
  %11 = xla_tuple %s9, %s10
  %s12 = sld [smem:[#allocation0]]
  $region54: #{video_rnn_forward.1} parent=0
    _
  %s14 = ssub.s32 1, %s12
  %s15 = scalar_select 0, %s14, %s12
  // Predicated region
  $region2: #{video_rnn_forward.1} parent=0 // pred_check
    _
  $region3: #{video_rnn_forward.1} parent=0 // pred_check_branch
    %17 = sbr.rel (0) target = $region5
  $region4: #{video_rnn_forward.1} parent=0 // pred_region
    _
  $region5: #{video_rnn_forward.1} parent=0 // pred_fallthru
    _
  // Predicated region
  $region6: #{video_rnn_forward.1} parent=0 // pred_check
    _
  $region7: #{video_rnn_forward.1} parent=0 // pred_check_branch
    %19 = sbr.rel (0) target = $region9
  $region8: #{video_rnn_forward.1} parent=0 // pred_region
    _
  $region9: #{video_rnn_forward.1} parent=0 // pred_fallthru
    _
  // Predicated region
  $region10: #{video_rnn_forward.1} parent=0 // pred_check
    _
  $region11: #{video_rnn_forward.1} parent=0 // pred_check_branch
    %21 = sbr.rel (0) target = $region13
  $region12: #{video_rnn_forward.1} parent=0 // pred_region
    _
  $region13: #{video_rnn_forward.1} parent=0 // pred_fallthru
    _
  // Predicated region
  $region14: #{video_rnn_forward.1} parent=0 // pred_check
    _
  $region15: #{video_rnn_forward.1} parent=0 // pred_check_branch
    %23 = sbr.rel (0) target = $region17
  $region16: #{video_rnn_forward.1} parent=0 // pred_region
    _
  $region17: #{video_rnn_forward.1} parent=0 // pred_fallthru
    _
  // Predicated region
  $region18: #{video_rnn_forward.1} parent=0 // pred_check
    _
  $region19: #{video_rnn_forward.1} parent=0 // pred_check_branch
    %25 = sbr.rel (0) target = $region21
  $region20: #{video_rnn_forward.1} parent=0 // pred_region
    _
  $region21: #{video_rnn_forward.1} parent=0 // pred_fallthru
    _
  // Predicated region
  $region22: #{video_rnn_forward.1} parent=0 // pred_check
    _
  $region23: #{video_rnn_forward.1} parent=0 // pred_check_branch
    %27 = sbr.rel (0) target = $region25
  $region24: #{video_rnn_forward.1} parent=0 // pred_region
    _
  $region25: #{video_rnn_forward.1} parent=0 // pred_fallthru
    _
  // Predicated region
  $region26: #{video_rnn_forward.1} parent=0 // pred_check
    _
  $region27: #{video_rnn_forward.1} parent=0 // pred_check_branch
    %29 = sbr.rel (0) target = $region29
  $region28: #{video_rnn_forward.1} parent=0 // pred_region
    _
  $region29: #{video_rnn_forward.1} parent=0 // pred_fallthru
    _
  // Predicated region
  $region30: #{video_rnn_forward.1} parent=0 // pred_check
    _
  $region31: #{video_rnn_forward.1} parent=0 // pred_check_branch
    %31 = sbr.rel (0) target = $region33
  $region32: #{video_rnn_forward.1} parent=0 // pred_region
    _
  $region33: #{video_rnn_forward.1} parent=0 // pred_fallthru
    _
  // Predicated region
  $region34: #{video_rnn_forward.1} parent=0 // pred_check
    _
  $region35: #{video_rnn_forward.1} parent=0 // pred_check_branch
    %33 = sbr.rel (0) target = $region37
  $region36: #{video_rnn_forward.1} parent=0 // pred_region
    _
  $region37: #{video_rnn_forward.1} parent=0 // pred_fallthru
    _
  %v35 = vld [vmem:[%s0] sm:$0xf]
  %v36 = vld [vmem:[%s0 + $0x4] sm:$0xf]
  %v37 = vld [vmem:[%s0 + $0x8] sm:$0xf]
  %v38 = vld [vmem:[%s0 + $0xc] sm:$0xf]
  %v39 = vld [vmem:[%s0 + $0x10] sm:$0xf]
  %v40 = vld [vmem:[%s0 + $0x14] sm:$0xf]
  %v41 = vld [vmem:[%s0 + $0x18] sm:$0xf]
  %v42 = vld [vmem:[%s0 + $0x1c] sm:$0xf]
  %v43 = vld [vmem:[%s1] sm:$0xf]
  %v44 = vld [vmem:[%s1 + $0x4] sm:$0xf]
  %v45 = vld [vmem:[%s1 + $0x8] sm:$0xf]
  %v46 = vld [vmem:[%s1 + $0xc] sm:$0xf]
  %v47 = vld [vmem:[%s1 + $0x10] sm:$0xf]
  %v48 = vld [vmem:[%s1 + $0x14] sm:$0xf]
  %v49 = vld [vmem:[%s1 + $0x18] sm:$0xf]
  %v50 = vld [vmem:[%s1 + $0x1c] sm:$0xf]
  %v51 = vld [vmem:[%s1 + $0x20] sm:$0xf]
  %v52 = vld [vmem:[%s1 + $0x24] sm:$0xf]
  %v53 = vld [vmem:[%s1 + $0x28] sm:$0xf]
  %v54 = vld [vmem:[%s1 + $0x2c] sm:$0xf]
  %v55 = vld [vmem:[%s1 + $0x30] sm:$0xf]
  %v56 = vld [vmem:[%s1 + $0x34] sm:$0xf]
  %v57 = vld [vmem:[%s1 + $0x38] sm:$0xf]
  %v58 = vld [vmem:[%s1 + $0x3c] sm:$0xf]
  %v59 = vld [vmem:[%s3] sm:$0x1]
  %v61 = vlaneseq
  %v62 = vshrl.u32 %v61, 7
  %v63 = vsub.s32 0, %v62
  %v64 = vrot.slane %v59, %v63
  %v74 = vunpack.c.l.b16 %v35
  %v75 = vunpack.c.l.b16 %v36
  %v76 = vunpack.c.l.b16 %v37
  %v77 = vunpack.c.l.b16 %v38
  %v78 = vunpack.c.l.b16 %v39
  %v79 = vunpack.c.l.b16 %v40
  %v80 = vunpack.c.l.b16 %v41
  %v81 = vunpack.c.l.b16 %v42
  %v82 = vpack.c.b16 %v75, %v74
  %v83 = vpack.c.b16 %v77, %v76
  %v84 = vpack.c.b16 %v79, %v78
  %v85 = vpack.c.b16 %v81, %v80
  %v106 = vunpack.c.l.b16 %v43
  %v107 = vunpack.c.l.b16 %v44
  %v108 = vunpack.c.l.b16 %v45
  %v109 = vunpack.c.l.b16 %v46
  %v110 = vunpack.c.l.b16 %v47
  %v111 = vunpack.c.l.b16 %v48
  %v112 = vunpack.c.l.b16 %v49
  %v113 = vunpack.c.l.b16 %v50
  %v114 = vunpack.c.l.b16 %v51
  %v115 = vunpack.c.l.b16 %v52
  %v116 = vunpack.c.l.b16 %v53
  %v117 = vunpack.c.l.b16 %v54
  %v118 = vunpack.c.l.b16 %v55
  %v119 = vunpack.c.l.b16 %v56
  %v120 = vunpack.c.l.b16 %v57
  %v121 = vunpack.c.l.b16 %v58
  %v122 = vpack.c.b16 %v107, %v106
  %v123 = vpack.c.b16 %v109, %v108
  %v124 = vpack.c.b16 %v111, %v110
  %v125 = vpack.c.b16 %v113, %v112
  %v126 = vpack.c.b16 %v115, %v114
  %v127 = vpack.c.b16 %v117, %v116
  %v128 = vpack.c.b16 %v119, %v118
  %v129 = vpack.c.b16 %v121, %v120
  %138 = vmatprep.subr.bf16.mxu0 0
  %139 = vmatpush1.bf16.msra.mxu0 %v129
  %140 = vmatprep.subr.bf16.mxu0 0
  %141 = vmatpush1.bf16.msra.mxu0 %v128
  %142 = vmatprep.subr.bf16.mxu0 0
  %143 = vmatpush1.bf16.msra.mxu0 %v127
  %144 = vmatprep.subr.bf16.mxu0 0
  %145 = vmatpush1.bf16.msra.mxu0 %v126
  %146 = vmatprep.subr.bf16.mxu0 0
  %147 = vmatpush1.bf16.msra.mxu0 %v125
  %148 = vmatprep.subr.bf16.mxu0 0
  %149 = vmatpush1.bf16.msra.mxu0 %v124
  %150 = vmatprep.subr.bf16.mxu0 0
  %151 = vmatpush1.bf16.msra.mxu0 %v123
  %152 = vmatprep.subr.bf16.mxu0 0
  %153 = vmatpush1.bf16.msra.mxu0 %v122
  %154 = vmatprep.subr.bf16.mxu0 0
  %155 = vmatpush2.bf16.msra.mxu0 0
  %156 = vmatprep.subr.bf16.mxu0 0
  %157 = vmatpush2.bf16.msra.mxu0 0
  %158 = vmatprep.subr.bf16.mxu0 0
  %159 = vmatpush2.bf16.msra.mxu0 0
  %160 = vmatprep.subr.bf16.mxu0 0
  %161 = vmatpush2.bf16.msra.mxu0 0
  %162 = vmatprep.subr.bf16.mxu0 0
  %163 = vmatpush2.bf16.msra.mxu0 0
  %164 = vmatprep.subr.bf16.mxu0 0
  %165 = vmatpush2.bf16.msra.mxu0 0
  %166 = vmatprep.subr.bf16.mxu0 0
  %167 = vmatpush2.bf16.msra.mxu0 0
  %168 = vmatprep.subr.bf16.mxu0 0
  %169 = vmatpush2.bf16.msra.mxu0 0
  %170 = vmatprep.mubr.bf16.mxu0 0
  %171 = vmatmul.mubr.bf16.gmra.mxu0 %v82
  %v172 = vpop.f32.mrf.mxu0
  %v173 = vadd.f32 %v64, %v172
  %v174 = vpop.f32.mrf.mxu0
  %v175 = vpop.f32.mrf.mxu0
  %v176 = vadd.f32 %v64, %v175
  %v177 = vpop.f32.mrf.mxu0
  %178 = vmatprep.mubr.bf16.mxu0 0
  %179 = vmatmul.mubr.bf16.gmra.mxu0 %v83
  %v180 = vpop.f32.mrf.mxu0
  %v181 = vadd.f32 %v64, %v180
  %v182 = vpop.f32.mrf.mxu0
  %v183 = vpop.f32.mrf.mxu0
  %v184 = vadd.f32 %v64, %v183
  %v185 = vpop.f32.mrf.mxu0
  %186 = vmatprep.mubr.bf16.mxu0 0
  %187 = vmatmul.mubr.bf16.gmra.mxu0 %v84
  %v188 = vpop.f32.mrf.mxu0
  %v189 = vadd.f32 %v64, %v188
  %v190 = vpop.f32.mrf.mxu0
  %v191 = vpop.f32.mrf.mxu0
  %v192 = vadd.f32 %v64, %v191
  %v193 = vpop.f32.mrf.mxu0
  %194 = vmatprep.mubr.bf16.mxu0 0
  %195 = vmatmul.mubr.bf16.gmra.mxu0 %v85
  %v196 = vpop.f32.mrf.mxu0
  %v197 = vadd.f32 %v64, %v196
  %v198 = vpop.f32.mrf.mxu0
  %v199 = vpop.f32.mrf.mxu0
  %v200 = vadd.f32 %v64, %v199
  %v201 = vpop.f32.mrf.mxu0
  %202 = vdwg.mxu0
  %203 = vst [vmem:[#allocation2] sm:$0xff] %v173
  %204 = vst [vmem:[#allocation2 + $0x8] sm:$0xff] %v176
  %205 = vst [vmem:[#allocation2 + $0x10] sm:$0xff] %v181
  %206 = vst [vmem:[#allocation2 + $0x18] sm:$0xff] %v184
  %207 = vst [vmem:[#allocation2 + $0x20] sm:$0xff] %v189
  %208 = vst [vmem:[#allocation2 + $0x28] sm:$0xff] %v192
  %209 = vst [vmem:[#allocation2 + $0x30] sm:$0xff] %v197
  %210 = vst [vmem:[#allocation2 + $0x38] sm:$0xff] %v200
  %v211 = vld [vmem:[%s2] sm:$0xf]
  %v212 = vld [vmem:[%s2 + $0x4] sm:$0xf]
  %v213 = vld [vmem:[%s2 + $0x8] sm:$0xf]
  %v214 = vld [vmem:[%s2 + $0xc] sm:$0xf]
  %v215 = vld [vmem:[%s2 + $0x10] sm:$0xf]
  %v216 = vld [vmem:[%s2 + $0x14] sm:$0xf]
  %v217 = vld [vmem:[%s2 + $0x18] sm:$0xf]
  %v218 = vld [vmem:[%s2 + $0x1c] sm:$0xf]
  %v219 = vld [vmem:[%s2 + $0x20] sm:$0xf]
  %v220 = vld [vmem:[%s2 + $0x24] sm:$0xf]
  %v221 = vld [vmem:[%s2 + $0x28] sm:$0xf]
  %v222 = vld [vmem:[%s2 + $0x2c] sm:$0xf]
  %v223 = vld [vmem:[%s2 + $0x30] sm:$0xf]
  %v224 = vld [vmem:[%s2 + $0x34] sm:$0xf]
  %v225 = vld [vmem:[%s2 + $0x38] sm:$0xf]
  %v226 = vld [vmem:[%s2 + $0x3c] sm:$0xf]
  %v227 = vld [vmem:[#allocation2] sm:$0xff]
  %v244 = vunpack.c.l.b16 %v211
  %v245 = vunpack.c.l.b16 %v212
  %v246 = vunpack.c.l.b16 %v213
  %v247 = vunpack.c.l.b16 %v214
  %v248 = vunpack.c.l.b16 %v215
  %v249 = vunpack.c.l.b16 %v216
  %v250 = vunpack.c.l.b16 %v217
  %v251 = vunpack.c.l.b16 %v218
  %v252 = vunpack.c.l.b16 %v219
  %v253 = vunpack.c.l.b16 %v220
  %v254 = vunpack.c.l.b16 %v221
  %v255 = vunpack.c.l.b16 %v222
  %v256 = vunpack.c.l.b16 %v223
  %v257 = vunpack.c.l.b16 %v224
  %v258 = vunpack.c.l.b16 %v225
  %v259 = vunpack.c.l.b16 %v226
  %v260 = vpack.c.b16 %v245, %v244
  %v261 = vpack.c.b16 %v247, %v246
  %v262 = vpack.c.b16 %v249, %v248
  %v263 = vpack.c.b16 %v251, %v250
  %v264 = vpack.c.b16 %v253, %v252
  %v265 = vpack.c.b16 %v255, %v254
  %v266 = vpack.c.b16 %v257, %v256
  %v267 = vpack.c.b16 %v259, %v258
  %276 = vmatprep.subr.bf16.mxu0 0
  %277 = vmatpush1.bf16.msra.mxu0 %v267
  %278 = vmatprep.subr.bf16.mxu0 0
  %279 = vmatpush1.bf16.msra.mxu0 %v266
  %280 = vmatprep.subr.bf16.mxu0 0
  %281 = vmatpush1.bf16.msra.mxu0 %v265
  %282 = vmatprep.subr.bf16.mxu0 0
  %283 = vmatpush1.bf16.msra.mxu0 %v264
  %284 = vmatprep.subr.bf16.mxu0 0
  %285 = vmatpush1.bf16.msra.mxu0 %v263
  %286 = vmatprep.subr.bf16.mxu0 0
  %287 = vmatpush1.bf16.msra.mxu0 %v262
  %288 = vmatprep.subr.bf16.mxu0 0
  %289 = vmatpush1.bf16.msra.mxu0 %v261
  %290 = vmatprep.subr.bf16.mxu0 0
  %291 = vmatpush1.bf16.msra.mxu0 %v260
  %292 = vmatprep.subr.bf16.mxu0 0
  %293 = vmatpush2.bf16.msra.mxu0 0
  %294 = vmatprep.subr.bf16.mxu0 0
  %295 = vmatpush2.bf16.msra.mxu0 0
  %296 = vmatprep.subr.bf16.mxu0 0
  %297 = vmatpush2.bf16.msra.mxu0 0
  %298 = vmatprep.subr.bf16.mxu0 0
  %299 = vmatpush2.bf16.msra.mxu0 0
  %300 = vmatprep.subr.bf16.mxu0 0
  %301 = vmatpush2.bf16.msra.mxu0 0
  %302 = vmatprep.subr.bf16.mxu0 0
  %303 = vmatpush2.bf16.msra.mxu0 0
  %304 = vmatprep.subr.bf16.mxu0 0
  %305 = vmatpush2.bf16.msra.mxu0 0
  %306 = vmatprep.subr.bf16.mxu0 0
  %307 = vmatpush2.bf16.msra.mxu0 0
  %308 = vmatprep.mubr.bf16.mxu0 0
  %309 = vmatmul.mubr.bf16.gmra.mxu0 0
  %v310 = vpop.f32.mrf.mxu0
  %v311 = vadd.f32 0.0, %v310
  %v312 = vpop.f32.mrf.mxu0
  %v313 = vpop.f32.mrf.mxu0
  %v314 = vpop.f32.mrf.mxu0
  %315 = vdwg.mxu0
  %v316 = vadd.f32 %v227, %v311
  %v317 = vtanh.pop %v316
  %318 = vst [vmem:[#allocation2] sm:$0xff] %v317
  %v319 = vld [vmem:[#allocation2 + $0x8] sm:$0xff]
  %v320 = vpack.c.bf16 %v317, %v317
  %321 = vmatprep.subr.bf16.mxu0 0
  %322 = vmatpush1.bf16.msra.mxu0 %v267
  %323 = vmatprep.subr.bf16.mxu0 0
  %324 = vmatpush1.bf16.msra.mxu0 %v266
  %325 = vmatprep.subr.bf16.mxu0 0
  %326 = vmatpush1.bf16.msra.mxu0 %v265
  %327 = vmatprep.subr.bf16.mxu0 0
  %328 = vmatpush1.bf16.msra.mxu0 %v264
  %329 = vmatprep.subr.bf16.mxu0 0
  %330 = vmatpush1.bf16.msra.mxu0 %v263
  %331 = vmatprep.subr.bf16.mxu0 0
  %332 = vmatpush1.bf16.msra.mxu0 %v262
  %333 = vmatprep.subr.bf16.mxu0 0
  %334 = vmatpush1.bf16.msra.mxu0 %v261
  %335 = vmatprep.subr.bf16.mxu0 0
  %336 = vmatpush1.bf16.msra.mxu0 %v260
  %337 = vmatprep.subr.bf16.mxu0 0
  %338 = vmatpush2.bf16.msra.mxu0 0
  %339 = vmatprep.subr.bf16.mxu0 0
  %340 = vmatpush2.bf16.msra.mxu0 0
  %341 = vmatprep.subr.bf16.mxu0 0
  %342 = vmatpush2.bf16.msra.mxu0 0
  %343 = vmatprep.subr.bf16.mxu0 0
  %344 = vmatpush2.bf16.msra.mxu0 0
  %345 = vmatprep.subr.bf16.mxu0 0
  %346 = vmatpush2.bf16.msra.mxu0 0
  %347 = vmatprep.subr.bf16.mxu0 0
  %348 = vmatpush2.bf16.msra.mxu0 0
  %349 = vmatprep.subr.bf16.mxu0 0
  %350 = vmatpush2.bf16.msra.mxu0 0
  %351 = vmatprep.subr.bf16.mxu0 0
  %352 = vmatpush2.bf16.msra.mxu0 0
  %353 = vmatprep.mubr.bf16.mxu0 0
  %354 = vmatmul.mubr.bf16.gmra.mxu0 %v320
  %v355 = vpop.f32.mrf.mxu0
  %v356 = vadd.f32 0.0, %v355
  %v357 = vpop.f32.mrf.mxu0
  %v358 = vpop.f32.mrf.mxu0
  %v359 = vpop.f32.mrf.mxu0
  %360 = vdwg.mxu0
  %v361 = vadd.f32 %v319, %v356
  %v362 = vtanh.pop %v361
  %363 = vst [vmem:[#allocation2 + $0x8] sm:$0xff] %v362
  %v364 = vld [vmem:[#allocation2 + $0x10] sm:$0xff]
  %v365 = vpack.c.bf16 %v362, %v362
  %366 = vmatprep.subr.bf16.mxu0 0
  %367 = vmatpush1.bf16.msra.mxu0 %v267
  %368 = vmatprep.subr.bf16.mxu0 0
  %369 = vmatpush1.bf16.msra.mxu0 %v266
  %370 = vmatprep.subr.bf16.mxu0 0
  %371 = vmatpush1.bf16.msra.mxu0 %v265
  %372 = vmatprep.subr.bf16.mxu0 0
  %373 = vmatpush1.bf16.msra.mxu0 %v264
  %374 = vmatprep.subr.bf16.mxu0 0
  %375 = vmatpush1.bf16.msra.mxu0 %v263
  %376 = vmatprep.subr.bf16.mxu0 0
  %377 = vmatpush1.bf16.msra.mxu0 %v262
  %378 = vmatprep.subr.bf16.mxu0 0
  %379 = vmatpush1.bf16.msra.mxu0 %v261
  %380 = vmatprep.subr.bf16.mxu0 0
  %381 = vmatpush1.bf16.msra.mxu0 %v260
  %382 = vmatprep.subr.bf16.mxu0 0
  %383 = vmatpush2.bf16.msra.mxu0 0
  %384 = vmatprep.subr.bf16.mxu0 0
  %385 = vmatpush2.bf16.msra.mxu0 0
  %386 = vmatprep.subr.bf16.mxu0 0
  %387 = vmatpush2.bf16.msra.mxu0 0
  %388 = vmatprep.subr.bf16.mxu0 0
  %389 = vmatpush2.bf16.msra.mxu0 0
  %390 = vmatprep.subr.bf16.mxu0 0
  %391 = vmatpush2.bf16.msra.mxu0 0
  %392 = vmatprep.subr.bf16.mxu0 0
  %393 = vmatpush2.bf16.msra.mxu0 0
  %394 = vmatprep.subr.bf16.mxu0 0
  %395 = vmatpush2.bf16.msra.mxu0 0
  %396 = vmatprep.subr.bf16.mxu0 0
  %397 = vmatpush2.bf16.msra.mxu0 0
  %398 = vmatprep.mubr.bf16.mxu0 0
  %399 = vmatmul.mubr.bf16.gmra.mxu0 %v365
  %v400 = vpop.f32.mrf.mxu0
  %v401 = vadd.f32 0.0, %v400
  %v402 = vpop.f32.mrf.mxu0
  %v403 = vpop.f32.mrf.mxu0
  %v404 = vpop.f32.mrf.mxu0
  %405 = vdwg.mxu0
  %v406 = vadd.f32 %v364, %v401
  %v407 = vtanh.pop %v406
  %408 = vst [vmem:[#allocation2 + $0x10] sm:$0xff] %v407
  %v409 = vld [vmem:[#allocation2 + $0x18] sm:$0xff]
  %v410 = vpack.c.bf16 %v407, %v407
  %411 = vmatprep.subr.bf16.mxu0 0
  %412 = vmatpush1.bf16.msra.mxu0 %v267
  %413 = vmatprep.subr.bf16.mxu0 0
  %414 = vmatpush1.bf16.msra.mxu0 %v266
  %415 = vmatprep.subr.bf16.mxu0 0
  %416 = vmatpush1.bf16.msra.mxu0 %v265
  %417 = vmatprep.subr.bf16.mxu0 0
  %418 = vmatpush1.bf16.msra.mxu0 %v264
  %419 = vmatprep.subr.bf16.mxu0 0
  %420 = vmatpush1.bf16.msra.mxu0 %v263
  %421 = vmatprep.subr.bf16.mxu0 0
  %422 = vmatpush1.bf16.msra.mxu0 %v262
  %423 = vmatprep.subr.bf16.mxu0 0
  %424 = vmatpush1.bf16.msra.mxu0 %v261
  %425 = vmatprep.subr.bf16.mxu0 0
  %426 = vmatpush1.bf16.msra.mxu0 %v260
  %427 = vmatprep.subr.bf16.mxu0 0
  %428 = vmatpush2.bf16.msra.mxu0 0
  %429 = vmatprep.subr.bf16.mxu0 0
  %430 = vmatpush2.bf16.msra.mxu0 0
  %431 = vmatprep.subr.bf16.mxu0 0
  %432 = vmatpush2.bf16.msra.mxu0 0
  %433 = vmatprep.subr.bf16.mxu0 0
  %434 = vmatpush2.bf16.msra.mxu0 0
  %435 = vmatprep.subr.bf16.mxu0 0
  %436 = vmatpush2.bf16.msra.mxu0 0
  %437 = vmatprep.subr.bf16.mxu0 0
  %438 = vmatpush2.bf16.msra.mxu0 0
  %439 = vmatprep.subr.bf16.mxu0 0
  %440 = vmatpush2.bf16.msra.mxu0 0
  %441 = vmatprep.subr.bf16.mxu0 0
  %442 = vmatpush2.bf16.msra.mxu0 0
  %443 = vmatprep.mubr.bf16.mxu0 0
  %444 = vmatmul.mubr.bf16.gmra.mxu0 %v410
  %v445 = vpop.f32.mrf.mxu0
  %v446 = vadd.f32 0.0, %v445
  %v447 = vpop.f32.mrf.mxu0
  %v448 = vpop.f32.mrf.mxu0
  %v449 = vpop.f32.mrf.mxu0
  %450 = vdwg.mxu0
  %v451 = vadd.f32 %v409, %v446
  %v452 = vtanh.pop %v451
  %453 = vst [vmem:[#allocation2 + $0x18] sm:$0xff] %v452
  %v454 = vld [vmem:[#allocation2 + $0x20] sm:$0xff]
  %v455 = vpack.c.bf16 %v452, %v452
  %456 = vmatprep.subr.bf16.mxu0 0
  %457 = vmatpush1.bf16.msra.mxu0 %v267
  %458 = vmatprep.subr.bf16.mxu0 0
  %459 = vmatpush1.bf16.msra.mxu0 %v266
  %460 = vmatprep.subr.bf16.mxu0 0
  %461 = vmatpush1.bf16.msra.mxu0 %v265
  %462 = vmatprep.subr.bf16.mxu0 0
  %463 = vmatpush1.bf16.msra.mxu0 %v264
  %464 = vmatprep.subr.bf16.mxu0 0
  %465 = vmatpush1.bf16.msra.mxu0 %v263
  %466 = vmatprep.subr.bf16.mxu0 0
  %467 = vmatpush1.bf16.msra.mxu0 %v262
  %468 = vmatprep.subr.bf16.mxu0 0
  %469 = vmatpush1.bf16.msra.mxu0 %v261
  %470 = vmatprep.subr.bf16.mxu0 0
  %471 = vmatpush1.bf16.msra.mxu0 %v260
  %472 = vmatprep.subr.bf16.mxu0 0
  %473 = vmatpush2.bf16.msra.mxu0 0
  %474 = vmatprep.subr.bf16.mxu0 0
  %475 = vmatpush2.bf16.msra.mxu0 0
  %476 = vmatprep.subr.bf16.mxu0 0
  %477 = vmatpush2.bf16.msra.mxu0 0
  %478 = vmatprep.subr.bf16.mxu0 0
  %479 = vmatpush2.bf16.msra.mxu0 0
  %480 = vmatprep.subr.bf16.mxu0 0
  %481 = vmatpush2.bf16.msra.mxu0 0
  %482 = vmatprep.subr.bf16.mxu0 0
  %483 = vmatpush2.bf16.msra.mxu0 0
  %484 = vmatprep.subr.bf16.mxu0 0
  %485 = vmatpush2.bf16.msra.mxu0 0
  %486 = vmatprep.subr.bf16.mxu0 0
  %487 = vmatpush2.bf16.msra.mxu0 0
  %488 = vmatprep.mubr.bf16.mxu0 0
  %489 = vmatmul.mubr.bf16.gmra.mxu0 %v455
  %v490 = vpop.f32.mrf.mxu0
  %v491 = vadd.f32 0.0, %v490
  %v492 = vpop.f32.mrf.mxu0
  %v493 = vpop.f32.mrf.mxu0
  %v494 = vpop.f32.mrf.mxu0
  %495 = vdwg.mxu0
  %v496 = vadd.f32 %v454, %v491
  %v497 = vtanh.pop %v496
  %498 = vst [vmem:[#allocation2 + $0x20] sm:$0xff] %v497
  %v499 = vld [vmem:[#allocation2 + $0x28] sm:$0xff]
  %v500 = vpack.c.bf16 %v497, %v497
  %501 = vmatprep.subr.bf16.mxu0 0
  %502 = vmatpush1.bf16.msra.mxu0 %v267
  %503 = vmatprep.subr.bf16.mxu0 0
  %504 = vmatpush1.bf16.msra.mxu0 %v266
  %505 = vmatprep.subr.bf16.mxu0 0
  %506 = vmatpush1.bf16.msra.mxu0 %v265
  %507 = vmatprep.subr.bf16.mxu0 0
  %508 = vmatpush1.bf16.msra.mxu0 %v264
  %509 = vmatprep.subr.bf16.mxu0 0
  %510 = vmatpush1.bf16.msra.mxu0 %v263
  %511 = vmatprep.subr.bf16.mxu0 0
  %512 = vmatpush1.bf16.msra.mxu0 %v262
  %513 = vmatprep.subr.bf16.mxu0 0
  %514 = vmatpush1.bf16.msra.mxu0 %v261
  %515 = vmatprep.subr.bf16.mxu0 0
  %516 = vmatpush1.bf16.msra.mxu0 %v260
  %517 = vmatprep.subr.bf16.mxu0 0
  %518 = vmatpush2.bf16.msra.mxu0 0
  %519 = vmatprep.subr.bf16.mxu0 0
  %520 = vmatpush2.bf16.msra.mxu0 0
  %521 = vmatprep.subr.bf16.mxu0 0
  %522 = vmatpush2.bf16.msra.mxu0 0
  %523 = vmatprep.subr.bf16.mxu0 0
  %524 = vmatpush2.bf16.msra.mxu0 0
  %525 = vmatprep.subr.bf16.mxu0 0
  %526 = vmatpush2.bf16.msra.mxu0 0
  %527 = vmatprep.subr.bf16.mxu0 0
  %528 = vmatpush2.bf16.msra.mxu0 0
  %529 = vmatprep.subr.bf16.mxu0 0
  %530 = vmatpush2.bf16.msra.mxu0 0
  %531 = vmatprep.subr.bf16.mxu0 0
  %532 = vmatpush2.bf16.msra.mxu0 0
  %533 = vmatprep.mubr.bf16.mxu0 0
  %534 = vmatmul.mubr.bf16.gmra.mxu0 %v500
  %v535 = vpop.f32.mrf.mxu0
  %v536 = vadd.f32 0.0, %v535
  %v537 = vpop.f32.mrf.mxu0
  %v538 = vpop.f32.mrf.mxu0
  %v539 = vpop.f32.mrf.mxu0
  %540 = vdwg.mxu0
  %v541 = vadd.f32 %v499, %v536
  %v542 = vtanh.pop %v541
  %543 = vst [vmem:[#allocation2 + $0x28] sm:$0xff] %v542
  %v544 = vld [vmem:[#allocation2 + $0x30] sm:$0xff]
  %v545 = vpack.c.bf16 %v542, %v542
  %546 = vmatprep.subr.bf16.mxu0 0
  %547 = vmatpush1.bf16.msra.mxu0 %v267
  %548 = vmatprep.subr.bf16.mxu0 0
  %549 = vmatpush1.bf16.msra.mxu0 %v266
  %550 = vmatprep.subr.bf16.mxu0 0
  %551 = vmatpush1.bf16.msra.mxu0 %v265
  %552 = vmatprep.subr.bf16.mxu0 0
  %553 = vmatpush1.bf16.msra.mxu0 %v264
  %554 = vmatprep.subr.bf16.mxu0 0
  %555 = vmatpush1.bf16.msra.mxu0 %v263
  %556 = vmatprep.subr.bf16.mxu0 0
  %557 = vmatpush1.bf16.msra.mxu0 %v262
  %558 = vmatprep.subr.bf16.mxu0 0
  %559 = vmatpush1.bf16.msra.mxu0 %v261
  %560 = vmatprep.subr.bf16.mxu0 0
  %561 = vmatpush1.bf16.msra.mxu0 %v260
  %562 = vmatprep.subr.bf16.mxu0 0
  %563 = vmatpush2.bf16.msra.mxu0 0
  %564 = vmatprep.subr.bf16.mxu0 0
  %565 = vmatpush2.bf16.msra.mxu0 0
  %566 = vmatprep.subr.bf16.mxu0 0
  %567 = vmatpush2.bf16.msra.mxu0 0
  %568 = vmatprep.subr.bf16.mxu0 0
  %569 = vmatpush2.bf16.msra.mxu0 0
  %570 = vmatprep.subr.bf16.mxu0 0
  %571 = vmatpush2.bf16.msra.mxu0 0
  %572 = vmatprep.subr.bf16.mxu0 0
  %573 = vmatpush2.bf16.msra.mxu0 0
  %574 = vmatprep.subr.bf16.mxu0 0
  %575 = vmatpush2.bf16.msra.mxu0 0
  %576 = vmatprep.subr.bf16.mxu0 0
  %577 = vmatpush2.bf16.msra.mxu0 0
  %578 = vmatprep.mubr.bf16.mxu0 0
  %579 = vmatmul.mubr.bf16.gmra.mxu0 %v545
  %v580 = vpop.f32.mrf.mxu0
  %v581 = vadd.f32 0.0, %v580
  %v582 = vpop.f32.mrf.mxu0
  %v583 = vpop.f32.mrf.mxu0
  %v584 = vpop.f32.mrf.mxu0
  %585 = vdwg.mxu0
  %v586 = vadd.f32 %v544, %v581
  %v587 = vtanh.pop %v586
  %588 = vst [vmem:[#allocation2 + $0x30] sm:$0xff] %v587
  %v589 = vld [vmem:[#allocation2 + $0x38] sm:$0xff]
  %v590 = vpack.c.bf16 %v587, %v587
  %591 = vmatprep.subr.bf16.mxu0 0
  %592 = vmatpush1.bf16.msra.mxu0 %v267
  %593 = vmatprep.subr.bf16.mxu0 0
  %594 = vmatpush1.bf16.msra.mxu0 %v266
  %595 = vmatprep.subr.bf16.mxu0 0
  %596 = vmatpush1.bf16.msra.mxu0 %v265
  %597 = vmatprep.subr.bf16.mxu0 0
  %598 = vmatpush1.bf16.msra.mxu0 %v264
  %599 = vmatprep.subr.bf16.mxu0 0
  %600 = vmatpush1.bf16.msra.mxu0 %v263
  %601 = vmatprep.subr.bf16.mxu0 0
  %602 = vmatpush1.bf16.msra.mxu0 %v262
  %603 = vmatprep.subr.bf16.mxu0 0
  %604 = vmatpush1.bf16.msra.mxu0 %v261
  %605 = vmatprep.subr.bf16.mxu0 0
  %606 = vmatpush1.bf16.msra.mxu0 %v260
  %607 = vmatprep.subr.bf16.mxu0 0
  %608 = vmatpush2.bf16.msra.mxu0 0
  %609 = vmatprep.subr.bf16.mxu0 0
  %610 = vmatpush2.bf16.msra.mxu0 0
  %611 = vmatprep.subr.bf16.mxu0 0
  %612 = vmatpush2.bf16.msra.mxu0 0
  %613 = vmatprep.subr.bf16.mxu0 0
  %614 = vmatpush2.bf16.msra.mxu0 0
  %615 = vmatprep.subr.bf16.mxu0 0
  %616 = vmatpush2.bf16.msra.mxu0 0
  %617 = vmatprep.subr.bf16.mxu0 0
  %618 = vmatpush2.bf16.msra.mxu0 0
  %619 = vmatprep.subr.bf16.mxu0 0
  %620 = vmatpush2.bf16.msra.mxu0 0
  %621 = vmatprep.subr.bf16.mxu0 0
  %622 = vmatpush2.bf16.msra.mxu0 0
  %623 = vmatprep.mubr.bf16.mxu0 0
  %624 = vmatmul.mubr.bf16.gmra.mxu0 %v590
  %v625 = vpop.f32.mrf.mxu0
  %v626 = vadd.f32 0.0, %v625
  %v627 = vpop.f32.mrf.mxu0
  %v628 = vpop.f32.mrf.mxu0
  %v629 = vpop.f32.mrf.mxu0
  %630 = vdwg.mxu0
  %v631 = vadd.f32 %v589, %v626
  %v632 = vtanh.pop %v631
  %633 = vst [vmem:[#allocation2 + $0x38] sm:$0xff] %v632
  %v634 = vld [vmem:[%s4] sm:$0xf]
  %v635 = vld [vmem:[%s4 + $0x4] sm:$0xf]
  %v636 = vld [vmem:[%s4 + $0x8] sm:$0xf]
  %v637 = vld [vmem:[%s4 + $0xc] sm:$0xf]
  %v638 = vld [vmem:[%s4 + $0x10] sm:$0xf]
  %v639 = vld [vmem:[%s4 + $0x14] sm:$0xf]
  %v640 = vld [vmem:[%s4 + $0x18] sm:$0xf]
  %v641 = vld [vmem:[%s4 + $0x1c] sm:$0xf]
  %v642 = vld [vmem:[%s4 + $0x20] sm:$0xf]
  %v643 = vld [vmem:[%s4 + $0x24] sm:$0xf]
  %v644 = vld [vmem:[%s4 + $0x28] sm:$0xf]
  %v645 = vld [vmem:[%s4 + $0x2c] sm:$0xf]
  %v646 = vld [vmem:[%s4 + $0x30] sm:$0xf]
  %v647 = vld [vmem:[%s4 + $0x34] sm:$0xf]
  %v648 = vld [vmem:[%s4 + $0x38] sm:$0xf]
  %v649 = vld [vmem:[%s4 + $0x3c] sm:$0xf]
  %v650 = vld [vmem:[%s6] sm:$0x1]
  %v651 = vld [vmem:[#allocation2] sm:$0xff]
  %v652 = vld [vmem:[#allocation2 + $0x8] sm:$0xff]
  %v653 = vld [vmem:[#allocation2 + $0x10] sm:$0xff]
  %v654 = vld [vmem:[#allocation2 + $0x18] sm:$0xff]
  %v655 = vld [vmem:[#allocation2 + $0x20] sm:$0xff]
  %v656 = vld [vmem:[#allocation2 + $0x28] sm:$0xff]
  %v657 = vld [vmem:[#allocation2 + $0x30] sm:$0xff]
  %v658 = vld [vmem:[#allocation2 + $0x38] sm:$0xff]
  %v659 = vpack.c.bf16 %v652, %v651
  %v660 = vpack.c.bf16 %v654, %v653
  %v661 = vpack.c.bf16 %v656, %v655
  %v662 = vpack.c.bf16 %v658, %v657
  %v664 = vlaneseq
  %v665 = vshrl.u32 %v664, 7
  %v666 = vsub.s32 0, %v665
  %v667 = vrot.slane %v650, %v666
  %v685 = vunpack.c.l.b16 %v634
  %v686 = vunpack.c.l.b16 %v635
  %v687 = vunpack.c.l.b16 %v636
  %v688 = vunpack.c.l.b16 %v637
  %v689 = vunpack.c.l.b16 %v638
  %v690 = vunpack.c.l.b16 %v639
  %v691 = vunpack.c.l.b16 %v640
  %v692 = vunpack.c.l.b16 %v641
  %v693 = vunpack.c.l.b16 %v642
  %v694 = vunpack.c.l.b16 %v643
  %v695 = vunpack.c.l.b16 %v644
  %v696 = vunpack.c.l.b16 %v645
  %v697 = vunpack.c.l.b16 %v646
  %v698 = vunpack.c.l.b16 %v647
  %v699 = vunpack.c.l.b16 %v648
  %v700 = vunpack.c.l.b16 %v649
  %v701 = vpack.c.b16 %v686, %v685
  %v702 = vpack.c.b16 %v688, %v687
  %v703 = vpack.c.b16 %v690, %v689
  %v704 = vpack.c.b16 %v692, %v691
  %v705 = vpack.c.b16 %v694, %v693
  %v706 = vpack.c.b16 %v696, %v695
  %v707 = vpack.c.b16 %v698, %v697
  %v708 = vpack.c.b16 %v700, %v699
  %717 = vmatprep.subr.bf16.mxu0 0
  %718 = vmatpush1.bf16.msra.mxu0 %v708
  %719 = vmatprep.subr.bf16.mxu0 0
  %720 = vmatpush1.bf16.msra.mxu0 %v707
  %721 = vmatprep.subr.bf16.mxu0 0
  %722 = vmatpush1.bf16.msra.mxu0 %v706
  %723 = vmatprep.subr.bf16.mxu0 0
  %724 = vmatpush1.bf16.msra.mxu0 %v705
  %725 = vmatprep.subr.bf16.mxu0 0
  %726 = vmatpush1.bf16.msra.mxu0 %v704
  %727 = vmatprep.subr.bf16.mxu0 0
  %728 = vmatpush1.bf16.msra.mxu0 %v703
  %729 = vmatprep.subr.bf16.mxu0 0
  %730 = vmatpush1.bf16.msra.mxu0 %v702
  %731 = vmatprep.subr.bf16.mxu0 0
  %732 = vmatpush1.bf16.msra.mxu0 %v701
  %733 = vmatprep.subr.bf16.mxu0 0
  %734 = vmatpush2.bf16.msra.mxu0 0
  %735 = vmatprep.subr.bf16.mxu0 0
  %736 = vmatpush2.bf16.msra.mxu0 0
  %737 = vmatprep.subr.bf16.mxu0 0
  %738 = vmatpush2.bf16.msra.mxu0 0
  %739 = vmatprep.subr.bf16.mxu0 0
  %740 = vmatpush2.bf16.msra.mxu0 0
  %741 = vmatprep.subr.bf16.mxu0 0
  %742 = vmatpush2.bf16.msra.mxu0 0
  %743 = vmatprep.subr.bf16.mxu0 0
  %744 = vmatpush2.bf16.msra.mxu0 0
  %745 = vmatprep.subr.bf16.mxu0 0
  %746 = vmatpush2.bf16.msra.mxu0 0
  %747 = vmatprep.subr.bf16.mxu0 0
  %748 = vmatpush2.bf16.msra.mxu0 0
  %749 = vmatprep.mubr.bf16.mxu0 0
  %750 = vmatmul.mubr.bf16.gmra.mxu0 %v659
  %v751 = vpop.f32.mrf.mxu0
  %v752 = vadd.f32 %v667, %v751
  %v753 = vpop.f32.mrf.mxu0
  %v754 = vpop.f32.mrf.mxu0
  %v755 = vadd.f32 %v667, %v754
  %v756 = vpop.f32.mrf.mxu0
  %757 = vmatprep.mubr.bf16.mxu0 0
  %758 = vmatmul.mubr.bf16.gmra.mxu0 %v660
  %v759 = vpop.f32.mrf.mxu0
  %v760 = vadd.f32 %v667, %v759
  %v761 = vpop.f32.mrf.mxu0
  %v762 = vpop.f32.mrf.mxu0
  %v763 = vadd.f32 %v667, %v762
  %v764 = vpop.f32.mrf.mxu0
  %765 = vmatprep.mubr.bf16.mxu0 0
  %766 = vmatmul.mubr.bf16.gmra.mxu0 %v661
  %v767 = vpop.f32.mrf.mxu0
  %v768 = vadd.f32 %v667, %v767
  %v769 = vpop.f32.mrf.mxu0
  %v770 = vpop.f32.mrf.mxu0
  %v771 = vadd.f32 %v667, %v770
  %v772 = vpop.f32.mrf.mxu0
  %773 = vmatprep.mubr.bf16.mxu0 0
  %774 = vmatmul.mubr.bf16.gmra.mxu0 %v662
  %v775 = vpop.f32.mrf.mxu0
  %v776 = vadd.f32 %v667, %v775
  %v777 = vpop.f32.mrf.mxu0
  %v778 = vpop.f32.mrf.mxu0
  %v779 = vadd.f32 %v667, %v778
  %v780 = vpop.f32.mrf.mxu0
  %781 = vdwg.mxu0
  %782 = vst [vmem:[#allocation2] sm:$0xff] %v752
  %783 = vst [vmem:[#allocation2 + $0x8] sm:$0xff] %v755
  %784 = vst [vmem:[#allocation2 + $0x10] sm:$0xff] %v760
  %785 = vst [vmem:[#allocation2 + $0x18] sm:$0xff] %v763
  %786 = vst [vmem:[#allocation2 + $0x20] sm:$0xff] %v768
  %787 = vst [vmem:[#allocation2 + $0x28] sm:$0xff] %v771
  %788 = vst [vmem:[#allocation2 + $0x30] sm:$0xff] %v776
  %789 = vst [vmem:[#allocation2 + $0x38] sm:$0xff] %v779
  %v790 = vld [vmem:[%s5] sm:$0xf]
  %v791 = vld [vmem:[%s5 + $0x4] sm:$0xf]
  %v792 = vld [vmem:[%s5 + $0x8] sm:$0xf]
  %v793 = vld [vmem:[%s5 + $0xc] sm:$0xf]
  %v794 = vld [vmem:[%s5 + $0x10] sm:$0xf]
  %v795 = vld [vmem:[%s5 + $0x14] sm:$0xf]
  %v796 = vld [vmem:[%s5 + $0x18] sm:$0xf]
  %v797 = vld [vmem:[%s5 + $0x1c] sm:$0xf]
  %v798 = vld [vmem:[%s5 + $0x20] sm:$0xf]
  %v799 = vld [vmem:[%s5 + $0x24] sm:$0xf]
  %v800 = vld [vmem:[%s5 + $0x28] sm:$0xf]
  %v801 = vld [vmem:[%s5 + $0x2c] sm:$0xf]
  %v802 = vld [vmem:[%s5 + $0x30] sm:$0xf]
  %v803 = vld [vmem:[%s5 + $0x34] sm:$0xf]
  %v804 = vld [vmem:[%s5 + $0x38] sm:$0xf]
  %v805 = vld [vmem:[%s5 + $0x3c] sm:$0xf]
  %v806 = vld [vmem:[#allocation2] sm:$0xff]
  %v823 = vunpack.c.l.b16 %v790
  %v824 = vunpack.c.l.b16 %v791
  %v825 = vunpack.c.l.b16 %v792
  %v826 = vunpack.c.l.b16 %v793
  %v827 = vunpack.c.l.b16 %v794
  %v828 = vunpack.c.l.b16 %v795
  %v829 = vunpack.c.l.b16 %v796
  %v830 = vunpack.c.l.b16 %v797
  %v831 = vunpack.c.l.b16 %v798
  %v832 = vunpack.c.l.b16 %v799
  %v833 = vunpack.c.l.b16 %v800
  %v834 = vunpack.c.l.b16 %v801
  %v835 = vunpack.c.l.b16 %v802
  %v836 = vunpack.c.l.b16 %v803
  %v837 = vunpack.c.l.b16 %v804
  %v838 = vunpack.c.l.b16 %v805
  %v839 = vpack.c.b16 %v824, %v823
  %v840 = vpack.c.b16 %v826, %v825
  %v841 = vpack.c.b16 %v828, %v827
  %v842 = vpack.c.b16 %v830, %v829
  %v843 = vpack.c.b16 %v832, %v831
  %v844 = vpack.c.b16 %v834, %v833
  %v845 = vpack.c.b16 %v836, %v835
  %v846 = vpack.c.b16 %v838, %v837
  %855 = vmatprep.subr.bf16.mxu0 0
  %856 = vmatpush1.bf16.msra.mxu0 %v846
  %857 = vmatprep.subr.bf16.mxu0 0
  %858 = vmatpush1.bf16.msra.mxu0 %v845
  %859 = vmatprep.subr.bf16.mxu0 0
  %860 = vmatpush1.bf16.msra.mxu0 %v844
  %861 = vmatprep.subr.bf16.mxu0 0
  %862 = vmatpush1.bf16.msra.mxu0 %v843
  %863 = vmatprep.subr.bf16.mxu0 0
  %864 = vmatpush1.bf16.msra.mxu0 %v842
  %865 = vmatprep.subr.bf16.mxu0 0
  %866 = vmatpush1.bf16.msra.mxu0 %v841
  %867 = vmatprep.subr.bf16.mxu0 0
  %868 = vmatpush1.bf16.msra.mxu0 %v840
  %869 = vmatprep.subr.bf16.mxu0 0
  %870 = vmatpush1.bf16.msra.mxu0 %v839
  %871 = vmatprep.subr.bf16.mxu0 0
  %872 = vmatpush2.bf16.msra.mxu0 0
  %873 = vmatprep.subr.bf16.mxu0 0
  %874 = vmatpush2.bf16.msra.mxu0 0
  %875 = vmatprep.subr.bf16.mxu0 0
  %876 = vmatpush2.bf16.msra.mxu0 0
  %877 = vmatprep.subr.bf16.mxu0 0
  %878 = vmatpush2.bf16.msra.mxu0 0
  %879 = vmatprep.subr.bf16.mxu0 0
  %880 = vmatpush2.bf16.msra.mxu0 0
  %881 = vmatprep.subr.bf16.mxu0 0
  %882 = vmatpush2.bf16.msra.mxu0 0
  %883 = vmatprep.subr.bf16.mxu0 0
  %884 = vmatpush2.bf16.msra.mxu0 0
  %885 = vmatprep.subr.bf16.mxu0 0
  %886 = vmatpush2.bf16.msra.mxu0 0
  %887 = vmatprep.mubr.bf16.mxu0 0
  %888 = vmatmul.mubr.bf16.gmra.mxu0 0
  %v889 = vpop.f32.mrf.mxu0
  %v890 = vadd.f32 0.0, %v889
  %v891 = vpop.f32.mrf.mxu0
  %v892 = vpop.f32.mrf.mxu0
  %v893 = vpop.f32.mrf.mxu0
  %894 = vdwg.mxu0
  %v895 = vadd.f32 %v806, %v890
  %v896 = vtanh.pop %v895
  %v897 = vld [vmem:[#allocation2 + $0x8] sm:$0xff]
  %v898 = vpack.c.bf16 %v896, %v896
  %899 = vmatprep.subr.bf16.mxu0 0
  %900 = vmatpush1.bf16.msra.mxu0 %v846
  %901 = vmatprep.subr.bf16.mxu0 0
  %902 = vmatpush1.bf16.msra.mxu0 %v845
  %903 = vmatprep.subr.bf16.mxu0 0
  %904 = vmatpush1.bf16.msra.mxu0 %v844
  %905 = vmatprep.subr.bf16.mxu0 0
  %906 = vmatpush1.bf16.msra.mxu0 %v843
  %907 = vmatprep.subr.bf16.mxu0 0
  %908 = vmatpush1.bf16.msra.mxu0 %v842
  %909 = vmatprep.subr.bf16.mxu0 0
  %910 = vmatpush1.bf16.msra.mxu0 %v841
  %911 = vmatprep.subr.bf16.mxu0 0
  %912 = vmatpush1.bf16.msra.mxu0 %v840
  %913 = vmatprep.subr.bf16.mxu0 0
  %914 = vmatpush1.bf16.msra.mxu0 %v839
  %915 = vmatprep.subr.bf16.mxu0 0
  %916 = vmatpush2.bf16.msra.mxu0 0
  %917 = vmatprep.subr.bf16.mxu0 0
  %918 = vmatpush2.bf16.msra.mxu0 0
  %919 = vmatprep.subr.bf16.mxu0 0
  %920 = vmatpush2.bf16.msra.mxu0 0
  %921 = vmatprep.subr.bf16.mxu0 0
  %922 = vmatpush2.bf16.msra.mxu0 0
  %923 = vmatprep.subr.bf16.mxu0 0
  %924 = vmatpush2.bf16.msra.mxu0 0
  %925 = vmatprep.subr.bf16.mxu0 0
  %926 = vmatpush2.bf16.msra.mxu0 0
  %927 = vmatprep.subr.bf16.mxu0 0
  %928 = vmatpush2.bf16.msra.mxu0 0
  %929 = vmatprep.subr.bf16.mxu0 0
  %930 = vmatpush2.bf16.msra.mxu0 0
  %931 = vmatprep.mubr.bf16.mxu0 0
  %932 = vmatmul.mubr.bf16.gmra.mxu0 %v898
  %v933 = vpop.f32.mrf.mxu0
  %v934 = vadd.f32 0.0, %v933
  %v935 = vpop.f32.mrf.mxu0
  %v936 = vpop.f32.mrf.mxu0
  %v937 = vpop.f32.mrf.mxu0
  %938 = vdwg.mxu0
  %v939 = vadd.f32 %v897, %v934
  %v940 = vtanh.pop %v939
  %v941 = vld [vmem:[#allocation2 + $0x10] sm:$0xff]
  %v942 = vpack.c.bf16 %v940, %v940
  %943 = vmatprep.subr.bf16.mxu0 0
  %944 = vmatpush1.bf16.msra.mxu0 %v846
  %945 = vmatprep.subr.bf16.mxu0 0
  %946 = vmatpush1.bf16.msra.mxu0 %v845
  %947 = vmatprep.subr.bf16.mxu0 0
  %948 = vmatpush1.bf16.msra.mxu0 %v844
  %949 = vmatprep.subr.bf16.mxu0 0
  %950 = vmatpush1.bf16.msra.mxu0 %v843
  %951 = vmatprep.subr.bf16.mxu0 0
  %952 = vmatpush1.bf16.msra.mxu0 %v842
  %953 = vmatprep.subr.bf16.mxu0 0
  %954 = vmatpush1.bf16.msra.mxu0 %v841
  %955 = vmatprep.subr.bf16.mxu0 0
  %956 = vmatpush1.bf16.msra.mxu0 %v840
  %957 = vmatprep.subr.bf16.mxu0 0
  %958 = vmatpush1.bf16.msra.mxu0 %v839
  %959 = vmatprep.subr.bf16.mxu0 0
  %960 = vmatpush2.bf16.msra.mxu0 0
  %961 = vmatprep.subr.bf16.mxu0 0
  %962 = vmatpush2.bf16.msra.mxu0 0
  %963 = vmatprep.subr.bf16.mxu0 0
  %964 = vmatpush2.bf16.msra.mxu0 0
  %965 = vmatprep.subr.bf16.mxu0 0
  %966 = vmatpush2.bf16.msra.mxu0 0
  %967 = vmatprep.subr.bf16.mxu0 0
  %968 = vmatpush2.bf16.msra.mxu0 0
  %969 = vmatprep.subr.bf16.mxu0 0
  %970 = vmatpush2.bf16.msra.mxu0 0
  %971 = vmatprep.subr.bf16.mxu0 0
  %972 = vmatpush2.bf16.msra.mxu0 0
  %973 = vmatprep.subr.bf16.mxu0 0
  %974 = vmatpush2.bf16.msra.mxu0 0
  %975 = vmatprep.mubr.bf16.mxu0 0
  %976 = vmatmul.mubr.bf16.gmra.mxu0 %v942
  %v977 = vpop.f32.mrf.mxu0
  %v978 = vadd.f32 0.0, %v977
  %v979 = vpop.f32.mrf.mxu0
  %v980 = vpop.f32.mrf.mxu0
  %v981 = vpop.f32.mrf.mxu0
  %982 = vdwg.mxu0
  %v983 = vadd.f32 %v941, %v978
  %v984 = vtanh.pop %v983
  %v985 = vld [vmem:[#allocation2 + $0x18] sm:$0xff]
  %v986 = vpack.c.bf16 %v984, %v984
  %987 = vmatprep.subr.bf16.mxu0 0
  %988 = vmatpush1.bf16.msra.mxu0 %v846
  %989 = vmatprep.subr.bf16.mxu0 0
  %990 = vmatpush1.bf16.msra.mxu0 %v845
  %991 = vmatprep.subr.bf16.mxu0 0
  %992 = vmatpush1.bf16.msra.mxu0 %v844
  %993 = vmatprep.subr.bf16.mxu0 0
  %994 = vmatpush1.bf16.msra.mxu0 %v843
  %995 = vmatprep.subr.bf16.mxu0 0
  %996 = vmatpush1.bf16.msra.mxu0 %v842
  %997 = vmatprep.subr.bf16.mxu0 0
  %998 = vmatpush1.bf16.msra.mxu0 %v841
  %999 = vmatprep.subr.bf16.mxu0 0
  %1000 = vmatpush1.bf16.msra.mxu0 %v840
  %1001 = vmatprep.subr.bf16.mxu0 0
  %1002 = vmatpush1.bf16.msra.mxu0 %v839
  %1003 = vmatprep.subr.bf16.mxu0 0
  %1004 = vmatpush2.bf16.msra.mxu0 0
  %1005 = vmatprep.subr.bf16.mxu0 0
  %1006 = vmatpush2.bf16.msra.mxu0 0
  %1007 = vmatprep.subr.bf16.mxu0 0
  %1008 = vmatpush2.bf16.msra.mxu0 0
  %1009 = vmatprep.subr.bf16.mxu0 0
  %1010 = vmatpush2.bf16.msra.mxu0 0
  %1011 = vmatprep.subr.bf16.mxu0 0
  %1012 = vmatpush2.bf16.msra.mxu0 0
  %1013 = vmatprep.subr.bf16.mxu0 0
  %1014 = vmatpush2.bf16.msra.mxu0 0
  %1015 = vmatprep.subr.bf16.mxu0 0
  %1016 = vmatpush2.bf16.msra.mxu0 0
  %1017 = vmatprep.subr.bf16.mxu0 0
  %1018 = vmatpush2.bf16.msra.mxu0 0
  %1019 = vmatprep.mubr.bf16.mxu0 0
  %1020 = vmatmul.mubr.bf16.gmra.mxu0 %v986
  %v1021 = vpop.f32.mrf.mxu0
  %v1022 = vadd.f32 0.0, %v1021
  %v1023 = vpop.f32.mrf.mxu0
  %v1024 = vpop.f32.mrf.mxu0
  %v1025 = vpop.f32.mrf.mxu0
  %1026 = vdwg.mxu0
  %v1027 = vadd.f32 %v985, %v1022
  %v1028 = vtanh.pop %v1027
  %v1029 = vld [vmem:[#allocation2 + $0x20] sm:$0xff]
  %v1030 = vpack.c.bf16 %v1028, %v1028
  %1031 = vmatprep.subr.bf16.mxu0 0
  %1032 = vmatpush1.bf16.msra.mxu0 %v846
  %1033 = vmatprep.subr.bf16.mxu0 0
  %1034 = vmatpush1.bf16.msra.mxu0 %v845
  %1035 = vmatprep.subr.bf16.mxu0 0
  %1036 = vmatpush1.bf16.msra.mxu0 %v844
  %1037 = vmatprep.subr.bf16.mxu0 0
  %1038 = vmatpush1.bf16.msra.mxu0 %v843
  %1039 = vmatprep.subr.bf16.mxu0 0
  %1040 = vmatpush1.bf16.msra.mxu0 %v842
  %1041 = vmatprep.subr.bf16.mxu0 0
  %1042 = vmatpush1.bf16.msra.mxu0 %v841
  %1043 = vmatprep.subr.bf16.mxu0 0
  %1044 = vmatpush1.bf16.msra.mxu0 %v840
  %1045 = vmatprep.subr.bf16.mxu0 0
  %1046 = vmatpush1.bf16.msra.mxu0 %v839
  %1047 = vmatprep.subr.bf16.mxu0 0
  %1048 = vmatpush2.bf16.msra.mxu0 0
  %1049 = vmatprep.subr.bf16.mxu0 0
  %1050 = vmatpush2.bf16.msra.mxu0 0
  %1051 = vmatprep.subr.bf16.mxu0 0
  %1052 = vmatpush2.bf16.msra.mxu0 0
  %1053 = vmatprep.subr.bf16.mxu0 0
  %1054 = vmatpush2.bf16.msra.mxu0 0
  %1055 = vmatprep.subr.bf16.mxu0 0
  %1056 = vmatpush2.bf16.msra.mxu0 0
  %1057 = vmatprep.subr.bf16.mxu0 0
  %1058 = vmatpush2.bf16.msra.mxu0 0
  %1059 = vmatprep.subr.bf16.mxu0 0
  %1060 = vmatpush2.bf16.msra.mxu0 0
  %1061 = vmatprep.subr.bf16.mxu0 0
  %1062 = vmatpush2.bf16.msra.mxu0 0
  %1063 = vmatprep.mubr.bf16.mxu0 0
  %1064 = vmatmul.mubr.bf16.gmra.mxu0 %v1030
  %v1065 = vpop.f32.mrf.mxu0
  %v1066 = vadd.f32 0.0, %v1065
  %v1067 = vpop.f32.mrf.mxu0
  %v1068 = vpop.f32.mrf.mxu0
  %v1069 = vpop.f32.mrf.mxu0
  %1070 = vdwg.mxu0
  %v1071 = vadd.f32 %v1029, %v1066
  %v1072 = vtanh.pop %v1071
  %v1073 = vld [vmem:[#allocation2 + $0x28] sm:$0xff]
  %v1074 = vpack.c.bf16 %v1072, %v1072
  %1075 = vmatprep.subr.bf16.mxu0 0
  %1076 = vmatpush1.bf16.msra.mxu0 %v846
  %1077 = vmatprep.subr.bf16.mxu0 0
  %1078 = vmatpush1.bf16.msra.mxu0 %v845
  %1079 = vmatprep.subr.bf16.mxu0 0
  %1080 = vmatpush1.bf16.msra.mxu0 %v844
  %1081 = vmatprep.subr.bf16.mxu0 0
  %1082 = vmatpush1.bf16.msra.mxu0 %v843
  %1083 = vmatprep.subr.bf16.mxu0 0
  %1084 = vmatpush1.bf16.msra.mxu0 %v842
  %1085 = vmatprep.subr.bf16.mxu0 0
  %1086 = vmatpush1.bf16.msra.mxu0 %v841
  %1087 = vmatprep.subr.bf16.mxu0 0
  %1088 = vmatpush1.bf16.msra.mxu0 %v840
  %1089 = vmatprep.subr.bf16.mxu0 0
  %1090 = vmatpush1.bf16.msra.mxu0 %v839
  %1091 = vmatprep.subr.bf16.mxu0 0
  %1092 = vmatpush2.bf16.msra.mxu0 0
  %1093 = vmatprep.subr.bf16.mxu0 0
  %1094 = vmatpush2.bf16.msra.mxu0 0
  %1095 = vmatprep.subr.bf16.mxu0 0
  %1096 = vmatpush2.bf16.msra.mxu0 0
  %1097 = vmatprep.subr.bf16.mxu0 0
  %1098 = vmatpush2.bf16.msra.mxu0 0
  %1099 = vmatprep.subr.bf16.mxu0 0
  %1100 = vmatpush2.bf16.msra.mxu0 0
  %1101 = vmatprep.subr.bf16.mxu0 0
  %1102 = vmatpush2.bf16.msra.mxu0 0
  %1103 = vmatprep.subr.bf16.mxu0 0
  %1104 = vmatpush2.bf16.msra.mxu0 0
  %1105 = vmatprep.subr.bf16.mxu0 0
  %1106 = vmatpush2.bf16.msra.mxu0 0
  %1107 = vmatprep.mubr.bf16.mxu0 0
  %1108 = vmatmul.mubr.bf16.gmra.mxu0 %v1074
  %v1109 = vpop.f32.mrf.mxu0
  %v1110 = vadd.f32 0.0, %v1109
  %v1111 = vpop.f32.mrf.mxu0
  %v1112 = vpop.f32.mrf.mxu0
  %v1113 = vpop.f32.mrf.mxu0
  %1114 = vdwg.mxu0
  %v1115 = vadd.f32 %v1073, %v1110
  %v1116 = vtanh.pop %v1115
  %v1117 = vld [vmem:[#allocation2 + $0x30] sm:$0xff]
  %v1118 = vpack.c.bf16 %v1116, %v1116
  %1119 = vmatprep.subr.bf16.mxu0 0
  %1120 = vmatpush1.bf16.msra.mxu0 %v846
  %1121 = vmatprep.subr.bf16.mxu0 0
  %1122 = vmatpush1.bf16.msra.mxu0 %v845
  %1123 = vmatprep.subr.bf16.mxu0 0
  %1124 = vmatpush1.bf16.msra.mxu0 %v844
  %1125 = vmatprep.subr.bf16.mxu0 0
  %1126 = vmatpush1.bf16.msra.mxu0 %v843
  %1127 = vmatprep.subr.bf16.mxu0 0
  %1128 = vmatpush1.bf16.msra.mxu0 %v842
  %1129 = vmatprep.subr.bf16.mxu0 0
  %1130 = vmatpush1.bf16.msra.mxu0 %v841
  %1131 = vmatprep.subr.bf16.mxu0 0
  %1132 = vmatpush1.bf16.msra.mxu0 %v840
  %1133 = vmatprep.subr.bf16.mxu0 0
  %1134 = vmatpush1.bf16.msra.mxu0 %v839
  %1135 = vmatprep.subr.bf16.mxu0 0
  %1136 = vmatpush2.bf16.msra.mxu0 0
  %1137 = vmatprep.subr.bf16.mxu0 0
  %1138 = vmatpush2.bf16.msra.mxu0 0
  %1139 = vmatprep.subr.bf16.mxu0 0
  %1140 = vmatpush2.bf16.msra.mxu0 0
  %1141 = vmatprep.subr.bf16.mxu0 0
  %1142 = vmatpush2.bf16.msra.mxu0 0
  %1143 = vmatprep.subr.bf16.mxu0 0
  %1144 = vmatpush2.bf16.msra.mxu0 0
  %1145 = vmatprep.subr.bf16.mxu0 0
  %1146 = vmatpush2.bf16.msra.mxu0 0
  %1147 = vmatprep.subr.bf16.mxu0 0
  %1148 = vmatpush2.bf16.msra.mxu0 0
  %1149 = vmatprep.subr.bf16.mxu0 0
  %1150 = vmatpush2.bf16.msra.mxu0 0
  %1151 = vmatprep.mubr.bf16.mxu0 0
  %1152 = vmatmul.mubr.bf16.gmra.mxu0 %v1118
  %v1153 = vpop.f32.mrf.mxu0
  %v1154 = vadd.f32 0.0, %v1153
  %v1155 = vpop.f32.mrf.mxu0
  %v1156 = vpop.f32.mrf.mxu0
  %v1157 = vpop.f32.mrf.mxu0
  %1158 = vdwg.mxu0
  %v1159 = vadd.f32 %v1117, %v1154
  %v1160 = vtanh.pop %v1159
  %v1161 = vld [vmem:[#allocation2 + $0x38] sm:$0xff]
  %v1162 = vpack.c.bf16 %v1160, %v1160
  %1163 = vmatprep.subr.bf16.mxu0 0
  %1164 = vmatpush1.bf16.msra.mxu0 %v846
  %1165 = vmatprep.subr.bf16.mxu0 0
  %1166 = vmatpush1.bf16.msra.mxu0 %v845
  %1167 = vmatprep.subr.bf16.mxu0 0
  %1168 = vmatpush1.bf16.msra.mxu0 %v844
  %1169 = vmatprep.subr.bf16.mxu0 0
  %1170 = vmatpush1.bf16.msra.mxu0 %v843
  %1171 = vmatprep.subr.bf16.mxu0 0
  %1172 = vmatpush1.bf16.msra.mxu0 %v842
  %1173 = vmatprep.subr.bf16.mxu0 0
  %1174 = vmatpush1.bf16.msra.mxu0 %v841
  %1175 = vmatprep.subr.bf16.mxu0 0
  %1176 = vmatpush1.bf16.msra.mxu0 %v840
  %1177 = vmatprep.subr.bf16.mxu0 0
  %1178 = vmatpush1.bf16.msra.mxu0 %v839
  %1179 = vmatprep.subr.bf16.mxu0 0
  %1180 = vmatpush2.bf16.msra.mxu0 0
  %1181 = vmatprep.subr.bf16.mxu0 0
  %1182 = vmatpush2.bf16.msra.mxu0 0
  %1183 = vmatprep.subr.bf16.mxu0 0
  %1184 = vmatpush2.bf16.msra.mxu0 0
  %1185 = vmatprep.subr.bf16.mxu0 0
  %1186 = vmatpush2.bf16.msra.mxu0 0
  %1187 = vmatprep.subr.bf16.mxu0 0
  %1188 = vmatpush2.bf16.msra.mxu0 0
  %1189 = vmatprep.subr.bf16.mxu0 0
  %1190 = vmatpush2.bf16.msra.mxu0 0
  %1191 = vmatprep.subr.bf16.mxu0 0
  %1192 = vmatpush2.bf16.msra.mxu0 0
  %1193 = vmatprep.subr.bf16.mxu0 0
  %1194 = vmatpush2.bf16.msra.mxu0 0
  %1195 = vmatprep.mubr.bf16.mxu0 0
  %1196 = vmatmul.mubr.bf16.gmra.mxu0 %v1162
  %v1197 = vpop.f32.mrf.mxu0
  %v1198 = vadd.f32 0.0, %v1197
  %v1199 = vpop.f32.mrf.mxu0
  %v1200 = vpop.f32.mrf.mxu0
  %v1201 = vpop.f32.mrf.mxu0
  %1202 = vdwg.mxu0
  %v1203 = vadd.f32 %v1161, %v1198
  %v1204 = vtanh.pop %v1203
  %1205 = vst [vmem:[%s10] sm:$0xff] %v1204
  %v1206 = vpack.c.bf16 %v1204, %v1204
  %v1207 = vld [vmem:[%s7] sm:$0xf]
  %v1208 = vld [vmem:[%s7 + $0x4] sm:$0xf]
  %v1209 = vld [vmem:[%s7 + $0x8] sm:$0xf]
  %v1210 = vld [vmem:[%s7 + $0xc] sm:$0xf]
  %v1211 = vld [vmem:[%s7 + $0x10] sm:$0xf]
  %v1212 = vld [vmem:[%s7 + $0x14] sm:$0xf]
  %v1213 = vld [vmem:[%s7 + $0x18] sm:$0xf]
  %v1214 = vld [vmem:[%s7 + $0x1c] sm:$0xf]
  %v1215 = vld [vmem:[%s7 + $0x20] sm:$0xf]
  %v1216 = vld [vmem:[%s7 + $0x24] sm:$0xf]
  %v1217 = vld [vmem:[%s7 + $0x28] sm:$0xf]
  %v1218 = vld [vmem:[%s7 + $0x2c] sm:$0xf]
  %v1219 = vld [vmem:[%s7 + $0x30] sm:$0xf]
  %v1220 = vld [vmem:[%s7 + $0x34] sm:$0xf]
  %v1221 = vld [vmem:[%s7 + $0x38] sm:$0xf]
  %v1222 = vld [vmem:[%s7 + $0x3c] sm:$0xf]
  %v1223 = vld [vmem:[%s8] sm:$0x1]
  %v1225 = vlaneseq
  %v1226 = vshrl.u32 %v1225, 7
  %v1227 = vsub.s32 0, %v1226
  %v1228 = vrot.slane %v1223, %v1227
  %v1246 = vunpack.c.l.b16 %v1207
  %v1247 = vunpack.c.l.b16 %v1208
  %v1248 = vunpack.c.l.b16 %v1209
  %v1249 = vunpack.c.l.b16 %v1210
  %v1250 = vunpack.c.l.b16 %v1211
  %v1251 = vunpack.c.l.b16 %v1212
  %v1252 = vunpack.c.l.b16 %v1213
  %v1253 = vunpack.c.l.b16 %v1214
  %v1254 = vunpack.c.l.b16 %v1215
  %v1255 = vunpack.c.l.b16 %v1216
  %v1256 = vunpack.c.l.b16 %v1217
  %v1257 = vunpack.c.l.b16 %v1218
  %v1258 = vunpack.c.l.b16 %v1219
  %v1259 = vunpack.c.l.b16 %v1220
  %v1260 = vunpack.c.l.b16 %v1221
  %v1261 = vunpack.c.l.b16 %v1222
  %v1262 = vpack.c.b16 %v1247, %v1246
  %v1263 = vpack.c.b16 %v1249, %v1248
  %v1264 = vpack.c.b16 %v1251, %v1250
  %v1265 = vpack.c.b16 %v1253, %v1252
  %v1266 = vpack.c.b16 %v1255, %v1254
  %v1267 = vpack.c.b16 %v1257, %v1256
  %v1268 = vpack.c.b16 %v1259, %v1258
  %v1269 = vpack.c.b16 %v1261, %v1260
  %1278 = vmatprep.subr.bf16.mxu0 0
  %1279 = vmatpush1.bf16.msra.mxu0 %v1269
  %1280 = vmatprep.subr.bf16.mxu0 0
  %1281 = vmatpush1.bf16.msra.mxu0 %v1268
  %1282 = vmatprep.subr.bf16.mxu0 0
  %1283 = vmatpush1.bf16.msra.mxu0 %v1267
  %1284 = vmatprep.subr.bf16.mxu0 0
  %1285 = vmatpush1.bf16.msra.mxu0 %v1266
  %1286 = vmatprep.subr.bf16.mxu0 0
  %1287 = vmatpush1.bf16.msra.mxu0 %v1265
  %1288 = vmatprep.subr.bf16.mxu0 0
  %1289 = vmatpush1.bf16.msra.mxu0 %v1264
  %1290 = vmatprep.subr.bf16.mxu0 0
  %1291 = vmatpush1.bf16.msra.mxu0 %v1263
  %1292 = vmatprep.subr.bf16.mxu0 0
  %1293 = vmatpush1.bf16.msra.mxu0 %v1262
  %1294 = vmatprep.subr.bf16.mxu0 0
  %1295 = vmatpush2.bf16.msra.mxu0 0
  %1296 = vmatprep.subr.bf16.mxu0 0
  %1297 = vmatpush2.bf16.msra.mxu0 0
  %1298 = vmatprep.subr.bf16.mxu0 0
  %1299 = vmatpush2.bf16.msra.mxu0 0
  %1300 = vmatprep.subr.bf16.mxu0 0
  %1301 = vmatpush2.bf16.msra.mxu0 0
  %1302 = vmatprep.subr.bf16.mxu0 0
  %1303 = vmatpush2.bf16.msra.mxu0 0
  %1304 = vmatprep.subr.bf16.mxu0 0
  %1305 = vmatpush2.bf16.msra.mxu0 0
  %1306 = vmatprep.subr.bf16.mxu0 0
  %1307 = vmatpush2.bf16.msra.mxu0 0
  %1308 = vmatprep.subr.bf16.mxu0 0
  %1309 = vmatpush2.bf16.msra.mxu0 0
  %1310 = vmatprep.mubr.bf16.mxu0 0
  %1311 = vmatmul.mubr.bf16.gmra.mxu0 %v1206
  %v1312 = vpop.f32.mrf.mxu0
  %v1313 = vadd.f32 %v1228, %v1312
  %v1314 = vpop.f32.mrf.mxu0
  %v1315 = vpop.f32.mrf.mxu0
  %v1316 = vpop.f32.mrf.mxu0
  %1317 = vdwg.mxu0
  %1318 = vst [vmem:[%s9] sm:$0xff] %v1313
  // Predicated region
  $region38: #{video_rnn_forward.1} parent=0 // pred_check
    _
  $region39: #{video_rnn_forward.1} parent=0 // pred_check_branch
    %1320 = sbr.rel (0) target = $region41
  $region40: #{video_rnn_forward.1} parent=0 // pred_region
    _
  $region41: #{video_rnn_forward.1} parent=0 // pred_fallthru
    _
  // Predicated region
  $region42: #{video_rnn_forward.1} parent=0 // pred_check
    _
  $region43: #{video_rnn_forward.1} parent=0 // pred_check_branch
    %1322 = sbr.rel (0) target = $region45
  $region44: #{video_rnn_forward.1} parent=0 // pred_region
    _
  $region45: #{video_rnn_forward.1} parent=0 // pred_fallthru
    _
  // Predicated region
  $region46: #{video_rnn_forward.1} parent=0 // pred_check
    _
  $region47: #{video_rnn_forward.1} parent=0 // pred_check_branch
    %1324 = sbr.rel (0) target = $region49
  $region48: #{video_rnn_forward.1} parent=0 // pred_region
    _
  $region49: #{video_rnn_forward.1} parent=0 // pred_fallthru
    _
  // Predicated region
  $region50: #{video_rnn_forward.1} parent=0 // pred_check
    _
  $region51: #{video_rnn_forward.1} parent=0 // pred_check_branch
    %1326 = sbr.rel (0) target = $region53
  $region52: #{video_rnn_forward.1} parent=0 // pred_region
    _
  $region53: #{video_rnn_forward.1} parent=0 // pred_fallthru
    _

</llo_original>
